<compile_context>
chip_gen: v7x
topology: tpu7x:2x2x1
jax: 0.10.0
libtpu: 0.0.40
codegen_flags: <defaults>
</compile_context>

<pallas_src>
import functools

import jax
import jax.numpy as jnp
from jax.experimental import pallas as pl
from jax.experimental.pallas import tpu as pltpu


def _gcn_shared_kernel(hid_ref, mask_ref, wagg_ref, bagg_ref,
                       wcat_ref, wupd2_ref, bupd_ref, out_ref, *, n_step):
    """One batch element, all n_step GCN iterations, pure 2-D (L, Dp) tiles."""
    L, Dp = out_ref.shape

    mask = mask_ref[...]                       # (L, Dp)
    wagg = wagg_ref[...]                       # (Dp, Dp)
    wcat = wcat_ref[...]                       # (Dp, 2*Dp)  = [W_attn_x | W_upd_x]
    wupd2 = wupd2_ref[...]                     # (Dp, Dp)    (multiplies agg)

    # Hoist bias broadcasts out of the unrolled step loop (JAX does not CSE them).
    bagg = jnp.broadcast_to(bagg_ref[...], (L, Dp))
    bupd = jnp.broadcast_to(bupd_ref[...], (L, Dp))

    hid = hid_ref[...]                         # (L, Dp)
    for _ in range(n_step):                    # n_step is static -> unrolled
        hid = hid * mask
        # xhid = agg(hid)
        xhid = jnp.dot(hid, wagg, preferred_element_type=jnp.float32) + bagg
        # One fused matmul for the two projections that share xhid as LHS.
        proj = jnp.dot(xhid, wcat, preferred_element_type=jnp.float32)  # (L, 2*Dp)
        attn_logits = proj[:, :Dp]             # xhid @ W_attn_x
        upd_x = proj[:, Dp:]                   # xhid @ W_upd_x
        # Softmax over L (axis=0).  The per-j term and the attention bias are
        # constant along this axis, so they cannot change the weights -> one
        # softmax replaces the original L-way loop.
        m = jnp.max(attn_logits, axis=0, keepdims=True)
        e = jnp.exp(attn_logits - m)
        denom = jnp.sum(e, axis=0, keepdims=True)
        attn_w = e * pl.reciprocal(denom, approx=True)
        sum_xhid = jnp.sum(attn_w * xhid, axis=0, keepdims=True)        # (1, Dp)
        # TODO(synk): attn_drop (nn.Dropout(0.33)) implemented as identity (eval mode).
        g = 1.0 / (1.0 + jnp.exp(-sum_xhid))                            # sigmoid, (1, Dp)
        agg = jnp.broadcast_to(g, (L, Dp))     # agg has L identical rows
        # hid = upd(cat([xhid, agg], -1)) == xhid @ W_upd_x + agg @ W_upd_agg + b
        hid = upd_x + jnp.dot(agg, wupd2, preferred_element_type=jnp.float32) + bupd

    out_ref[...] = hid


def _pad2(w, rows, cols):
    return jnp.pad(w, ((0, rows - w.shape[0]), (0, cols - w.shape[1])))


def gcn_shared_forward(feat, mask, params, n_step=3):
    """feat: (bs, l_sent, n_inp) f32, mask: (bs, l_sent) f32."""
    bs, l_sent, n_inp = feat.shape
    n = n_inp
    dp = ((n_inp + 127) // 128) * 128          # lane-dense padded feature dim

    # PyTorch Linear layout is (out_features, in_features); pre-transpose and
    # zero-pad so in-kernel matmuls are plain `x @ W + b`.
    wagg_k = _pad2(params['w_agg'].T, dp, dp)
    wat1 = _pad2(params['w_attn'][:, :n].T, dp, dp)   # multiplies xhid
    wupd1 = _pad2(params['w_upd'][:, :n].T, dp, dp)   # multiplies xhid
    wupd2_k = _pad2(params['w_upd'][:, n:].T, dp, dp)  # multiplies agg
    wcat_k = jnp.concatenate([wat1, wupd1], axis=1)    # (dp, 2*dp)
    bagg_k = _pad2(params['b_agg'].reshape(1, n), 1, dp)
    bupd_k = _pad2(params['b_upd'].reshape(1, n), 1, dp)
    # NOTE: w_attn[:, n:] and b_attn are provably inert (constant along the
    # softmax axis) and are not passed to the kernel.

    feat_p = jnp.pad(feat.astype(jnp.float32), ((0, 0), (0, 0), (0, dp - n_inp)))
    mask_b = jnp.broadcast_to(mask.astype(jnp.float32)[:, :, None],
                              (bs, l_sent, dp))

    flops = int(2 * bs * n_step * l_sent * dp * (dp + 2 * dp + dp))
    transcendentals = int(bs * n_step * dp * (l_sent + 2))
    bytes_accessed = int(4 * (3 * bs * l_sent * dp            # feat in/out + mask
                              + 2 * dp * dp + dp * 2 * dp     # weights
                              + 2 * dp))                      # biases

    kernel = functools.partial(_gcn_shared_kernel, n_step=n_step)
    out_p = pl.pallas_call(
        kernel,
        out_shape=jax.ShapeDtypeStruct((bs, l_sent, dp), jnp.float32),
        grid=(bs,),
        in_specs=[
            pl.BlockSpec((None, l_sent, dp), lambda b: (b, 0, 0)),   # feat
            pl.BlockSpec((None, l_sent, dp), lambda b: (b, 0, 0)),   # mask
            pl.BlockSpec((dp, dp), lambda b: (0, 0)),                # wagg
            pl.BlockSpec((1, dp), lambda b: (0, 0)),                 # bagg
            pl.BlockSpec((dp, 2 * dp), lambda b: (0, 0)),            # [wat1|wupd1]
            pl.BlockSpec((dp, dp), lambda b: (0, 0)),                # wupd2
            pl.BlockSpec((1, dp), lambda b: (0, 0)),                 # bupd
        ],
        out_specs=pl.BlockSpec((None, l_sent, dp), lambda b: (b, 0, 0)),
        compiler_params=pltpu.CompilerParams(
            dimension_semantics=("parallel",)),
        cost_estimate=pl.CostEstimate(
            flops=flops, transcendentals=transcendentals,
            bytes_accessed=bytes_accessed),
    )(feat_p, mask_b, wagg_k, bagg_k, wcat_k, wupd2_k, bupd_k)

    return out_p[:, :, :n_inp]


def init_params(key, n_inp):
    """Deterministic init mimicking nn.Linear's uniform(-1/sqrt(fan_in), ...)."""
    def uni(k, shape, fan_in):
        bound = 1.0 / float(fan_in) ** 0.5
        return jax.random.uniform(k, shape, jnp.float32, -bound, bound)

    ks = jax.random.split(key, 6)
    return dict(
        w_agg=uni(ks[0], (n_inp, n_inp), n_inp),
        b_agg=uni(ks[1], (n_inp,), n_inp),
        w_attn=uni(ks[2], (n_inp, 2 * n_inp), 2 * n_inp),
        b_attn=uni(ks[3], (n_inp,), 2 * n_inp),
        w_upd=uni(ks[4], (n_inp, 2 * n_inp), 2 * n_inp),
        b_upd=uni(ks[5], (n_inp,), 2 * n_inp),
    )


def gcn_shared_reference(feat, mask, params, n_step=3):
    """Literal JAX translation of the PyTorch forward (dropout = identity)."""
    bs, l_sent, n_inp = feat.shape
    hid = feat
    for _ in range(n_step):
        hid = hid * mask.reshape(bs, l_sent, 1)
        xhid = hid @ params['w_agg'].T + params['b_agg']
        agg_res = []
        for j in range(l_sent):
            xj = jnp.broadcast_to(xhid[:, j:j + 1, :], xhid.shape)
            cat = jnp.concatenate([xhid, xj], axis=2)
            attn = cat @ params['w_attn'].T + params['b_attn']
            attn_weight = jax.nn.softmax(attn, axis=1)
            sum_xhid = jnp.sum(attn_weight * xhid, axis=1, keepdims=True)
            agg_res.append(jax.nn.sigmoid(sum_xhid))
        agg = jnp.concatenate(agg_res, axis=1)
        cat2 = jnp.concatenate([xhid, agg], axis=2)
        hid = cat2 @ params['w_upd'].T + params['b_upd']
    return hid


if __name__ == "__main__":
    bs, l_sent, n_inp, n_step = 2, 8, 32, 3
    key = jax.random.PRNGKey(0)
    kf, km, kp = jax.random.split(key, 3)

    feat = jax.random.normal(kf, (bs, l_sent, n_inp), jnp.float32)
    mask = (jax.random.uniform(km, (bs, l_sent)) > 0.2).astype(jnp.float32)
    params = init_params(kp, n_inp)

    out = jax.block_until_ready(gcn_shared_forward(feat, mask, params, n_step))
    ref = gcn_shared_reference(feat, mask, params, n_step)

    assert out.shape == (bs, l_sent, n_inp)
    max_diff = float(jnp.max(jnp.abs(out - ref)))
    # Slightly loose tolerance: approx reciprocal in the softmax normalization.
    assert jnp.allclose(out, ref, atol=3e-3, rtol=3e-3), (
        f"mismatch vs reference, max abs diff = {max_diff}")
    print("KERNEL_OK")
</pallas_src>

<mosaic_0001>
module attributes {stable_mosaic.version = 11 : i64} {
  func.func @_gcn_shared_kernel(%arg0: i32, %arg1: memref<1x8x128xf32, #tpu.memory_space<vmem>>, %arg2: memref<1x8x128xf32, #tpu.memory_space<vmem>>, %arg3: memref<128x128xf32, #tpu.memory_space<vmem>>, %arg4: memref<1x128xf32, #tpu.memory_space<vmem>>, %arg5: memref<128x256xf32, #tpu.memory_space<vmem>>, %arg6: memref<128x128xf32, #tpu.memory_space<vmem>>, %arg7: memref<1x128xf32, #tpu.memory_space<vmem>>, %arg8: memref<1x8x128xf32, #tpu.memory_space<vmem>>) attributes {dimension_semantics = [#tpu.dimension_semantics<parallel>], iteration_bounds = array<i64: 2>, scalar_prefetch = 0 : i64, scratch_operands = 0 : i64, tpu.core_type = #tpu.core_type<tc>, window_params = [{transform_indices = @transform_0, window_bounds = array<i64: 1, 8, 128>}, {transform_indices = @transform_1, window_bounds = array<i64: 1, 8, 128>}, {pipeline_mode = #tpu.pipeline_mode<synchronous>, transform_indices = @transform_2, window_bounds = array<i64: 128, 128>}, {pipeline_mode = #tpu.pipeline_mode<synchronous>, transform_indices = @transform_3, window_bounds = array<i64: 1, 128>}, {pipeline_mode = #tpu.pipeline_mode<synchronous>, transform_indices = @transform_4, window_bounds = array<i64: 128, 256>}, {pipeline_mode = #tpu.pipeline_mode<synchronous>, transform_indices = @transform_5, window_bounds = array<i64: 128, 128>}, {pipeline_mode = #tpu.pipeline_mode<synchronous>, transform_indices = @transform_6, window_bounds = array<i64: 1, 128>}, {transform_indices = @transform_7, window_bounds = array<i64: 1, 8, 128>}]} {
    %c0 = arith.constant 0 : index
    %c0_0 = arith.constant 0 : index
    %c0_1 = arith.constant 0 : index
    %0 = vector.load %arg2[%c0, %c0_0, %c0_1] : memref<1x8x128xf32, #tpu.memory_space<vmem>>, vector<1x8x128xf32>
    %1 = vector.shape_cast %0 : vector<1x8x128xf32> to vector<8x128xf32>
    %c0_2 = arith.constant 0 : index
    %c0_3 = arith.constant 0 : index
    %2 = vector.load %arg3[%c0_2, %c0_3] : memref<128x128xf32, #tpu.memory_space<vmem>>, vector<128x128xf32>
    %c0_4 = arith.constant 0 : index
    %c0_5 = arith.constant 0 : index
    %3 = vector.load %arg5[%c0_4, %c0_5] : memref<128x256xf32, #tpu.memory_space<vmem>>, vector<128x256xf32>
    %c0_6 = arith.constant 0 : index
    %c0_7 = arith.constant 0 : index
    %4 = vector.load %arg6[%c0_6, %c0_7] : memref<128x128xf32, #tpu.memory_space<vmem>>, vector<128x128xf32>
    %c0_8 = arith.constant 0 : index
    %c0_9 = arith.constant 0 : index
    %5 = vector.load %arg4[%c0_8, %c0_9] : memref<1x128xf32, #tpu.memory_space<vmem>>, vector<1x128xf32>
    %6 = vector.shape_cast %5 : vector<1x128xf32> to vector<1x128xf32>
    %7 = vector.broadcast %6 : vector<1x128xf32> to vector<8x128xf32>
    %c0_10 = arith.constant 0 : index
    %c0_11 = arith.constant 0 : index
    %8 = vector.load %arg7[%c0_10, %c0_11] : memref<1x128xf32, #tpu.memory_space<vmem>>, vector<1x128xf32>
    %9 = vector.shape_cast %8 : vector<1x128xf32> to vector<1x128xf32>
    %10 = vector.broadcast %9 : vector<1x128xf32> to vector<8x128xf32>
    %c0_12 = arith.constant 0 : index
    %c0_13 = arith.constant 0 : index
    %c0_14 = arith.constant 0 : index
    %11 = vector.load %arg1[%c0_12, %c0_13, %c0_14] : memref<1x8x128xf32, #tpu.memory_space<vmem>>, vector<1x8x128xf32>
    %12 = vector.shape_cast %11 : vector<1x8x128xf32> to vector<8x128xf32>
    %13 = arith.mulf %12, %1 : vector<8x128xf32>
    %cst = arith.constant dense<0.000000e+00> : vector<8x128xf32>
    %14 = tpu.matmul %13, %2, %cst {dimension_numbers = #tpu.dot_dimension_numbers<[1], [0], [0], [1], [0, 0, 1, 1], [], []>} : vector<8x128xf32>, vector<128x128xf32>, vector<8x128xf32> -> vector<8x128xf32>
    %15 = arith.addf %14, %7 : vector<8x128xf32>
    %cst_15 = arith.constant dense<0.000000e+00> : vector<8x256xf32>
    %16 = tpu.matmul %15, %3, %cst_15 {dimension_numbers = #tpu.dot_dimension_numbers<[1], [0], [0], [1], [0, 0, 1, 1], [], []>} : vector<8x128xf32>, vector<128x256xf32>, vector<8x256xf32> -> vector<8x256xf32>
    %17 = vector.extract_strided_slice %16 {offsets = [0, 0], sizes = [8, 128], strides = [1, 1]} : vector<8x256xf32> to vector<8x128xf32>
    %18 = vector.extract_strided_slice %16 {offsets = [0, 128], sizes = [8, 128], strides = [1, 1]} : vector<8x256xf32> to vector<8x128xf32>
    %cst_16 = arith.constant dense<0xFF800000> : vector<128xf32>
    %19 = vector.multi_reduction <maximumf>, %17, %cst_16 [0] : vector<8x128xf32> to vector<128xf32>
    %20 = vector.shape_cast %19 : vector<128xf32> to vector<1x128xf32>
    %21 = vector.broadcast %20 : vector<1x128xf32> to vector<8x128xf32>
    %22 = arith.subf %17, %21 : vector<8x128xf32>
    %23 = math.exp %22 : vector<8x128xf32>
    %cst_17 = arith.constant dense<0.000000e+00> : vector<128xf32>
    %24 = vector.multi_reduction <add>, %23, %cst_17 [0] : vector<8x128xf32> to vector<128xf32>
    %25 = vector.shape_cast %24 : vector<128xf32> to vector<1x128xf32>
    %26 = tpu.reciprocal %25 {approx = true} : vector<1x128xf32> -> vector<1x128xf32>
    %27 = vector.broadcast %26 : vector<1x128xf32> to vector<8x128xf32>
    %28 = arith.mulf %23, %27 : vector<8x128xf32>
    %29 = arith.mulf %28, %15 : vector<8x128xf32>
    %cst_18 = arith.constant dense<0.000000e+00> : vector<128xf32>
    %30 = vector.multi_reduction <add>, %29, %cst_18 [0] : vector<8x128xf32> to vector<128xf32>
    %31 = vector.shape_cast %30 : vector<128xf32> to vector<1x128xf32>
    %cst_19 = arith.constant 0.000000e+00 : f32
    %32 = vector.broadcast %cst_19 : f32 to vector<1x128xf32>
    %33 = arith.subf %32, %31 : vector<1x128xf32>
    %34 = math.exp %33 : vector<1x128xf32>
    %cst_20 = arith.constant 1.000000e+00 : f32
    %35 = vector.broadcast %cst_20 : f32 to vector<1x128xf32>
    %36 = arith.addf %35, %34 : vector<1x128xf32>
    %cst_21 = arith.constant 1.000000e+00 : f32
    %37 = vector.broadcast %cst_21 : f32 to vector<1x128xf32>
    %38 = arith.divf %37, %36 : vector<1x128xf32>
    %39 = vector.shape_cast %38 : vector<1x128xf32> to vector<1x128xf32>
    %40 = vector.broadcast %39 : vector<1x128xf32> to vector<8x128xf32>
    %cst_22 = arith.constant dense<0.000000e+00> : vector<8x128xf32>
    %41 = tpu.matmul %40, %4, %cst_22 {dimension_numbers = #tpu.dot_dimension_numbers<[1], [0], [0], [1], [0, 0, 1, 1], [], []>} : vector<8x128xf32>, vector<128x128xf32>, vector<8x128xf32> -> vector<8x128xf32>
    %42 = arith.addf %18, %41 : vector<8x128xf32>
    %43 = arith.addf %42, %10 : vector<8x128xf32>
    %44 = arith.mulf %43, %1 : vector<8x128xf32>
    %cst_23 = arith.constant dense<0.000000e+00> : vector<8x128xf32>
    %45 = tpu.matmul %44, %2, %cst_23 {dimension_numbers = #tpu.dot_dimension_numbers<[1], [0], [0], [1], [0, 0, 1, 1], [], []>} : vector<8x128xf32>, vector<128x128xf32>, vector<8x128xf32> -> vector<8x128xf32>
    %46 = arith.addf %45, %7 : vector<8x128xf32>
    %cst_24 = arith.constant dense<0.000000e+00> : vector<8x256xf32>
    %47 = tpu.matmul %46, %3, %cst_24 {dimension_numbers = #tpu.dot_dimension_numbers<[1], [0], [0], [1], [0, 0, 1, 1], [], []>} : vector<8x128xf32>, vector<128x256xf32>, vector<8x256xf32> -> vector<8x256xf32>
    %48 = vector.extract_strided_slice %47 {offsets = [0, 0], sizes = [8, 128], strides = [1, 1]} : vector<8x256xf32> to vector<8x128xf32>
    %49 = vector.extract_strided_slice %47 {offsets = [0, 128], sizes = [8, 128], strides = [1, 1]} : vector<8x256xf32> to vector<8x128xf32>
    %cst_25 = arith.constant dense<0xFF800000> : vector<128xf32>
    %50 = vector.multi_reduction <maximumf>, %48, %cst_25 [0] : vector<8x128xf32> to vector<128xf32>
    %51 = vector.shape_cast %50 : vector<128xf32> to vector<1x128xf32>
    %52 = vector.broadcast %51 : vector<1x128xf32> to vector<8x128xf32>
    %53 = arith.subf %48, %52 : vector<8x128xf32>
    %54 = math.exp %53 : vector<8x128xf32>
    %cst_26 = arith.constant dense<0.000000e+00> : vector<128xf32>
    %55 = vector.multi_reduction <add>, %54, %cst_26 [0] : vector<8x128xf32> to vector<128xf32>
    %56 = vector.shape_cast %55 : vector<128xf32> to vector<1x128xf32>
    %57 = tpu.reciprocal %56 {approx = true} : vector<1x128xf32> -> vector<1x128xf32>
    %58 = vector.broadcast %57 : vector<1x128xf32> to vector<8x128xf32>
    %59 = arith.mulf %54, %58 : vector<8x128xf32>
    %60 = arith.mulf %59, %46 : vector<8x128xf32>
    %cst_27 = arith.constant dense<0.000000e+00> : vector<128xf32>
    %61 = vector.multi_reduction <add>, %60, %cst_27 [0] : vector<8x128xf32> to vector<128xf32>
    %62 = vector.shape_cast %61 : vector<128xf32> to vector<1x128xf32>
    %cst_28 = arith.constant 0.000000e+00 : f32
    %63 = vector.broadcast %cst_28 : f32 to vector<1x128xf32>
    %64 = arith.subf %63, %62 : vector<1x128xf32>
    %65 = math.exp %64 : vector<1x128xf32>
    %cst_29 = arith.constant 1.000000e+00 : f32
    %66 = vector.broadcast %cst_29 : f32 to vector<1x128xf32>
    %67 = arith.addf %66, %65 : vector<1x128xf32>
    %cst_30 = arith.constant 1.000000e+00 : f32
    %68 = vector.broadcast %cst_30 : f32 to vector<1x128xf32>
    %69 = arith.divf %68, %67 : vector<1x128xf32>
    %70 = vector.shape_cast %69 : vector<1x128xf32> to vector<1x128xf32>
    %71 = vector.broadcast %70 : vector<1x128xf32> to vector<8x128xf32>
    %cst_31 = arith.constant dense<0.000000e+00> : vector<8x128xf32>
    %72 = tpu.matmul %71, %4, %cst_31 {dimension_numbers = #tpu.dot_dimension_numbers<[1], [0], [0], [1], [0, 0, 1, 1], [], []>} : vector<8x128xf32>, vector<128x128xf32>, vector<8x128xf32> -> vector<8x128xf32>
    %73 = arith.addf %49, %72 : vector<8x128xf32>
    %74 = arith.addf %73, %10 : vector<8x128xf32>
    %75 = arith.mulf %74, %1 : vector<8x128xf32>
    %cst_32 = arith.constant dense<0.000000e+00> : vector<8x128xf32>
    %76 = tpu.matmul %75, %2, %cst_32 {dimension_numbers = #tpu.dot_dimension_numbers<[1], [0], [0], [1], [0, 0, 1, 1], [], []>} : vector<8x128xf32>, vector<128x128xf32>, vector<8x128xf32> -> vector<8x128xf32>
    %77 = arith.addf %76, %7 : vector<8x128xf32>
    %cst_33 = arith.constant dense<0.000000e+00> : vector<8x256xf32>
    %78 = tpu.matmul %77, %3, %cst_33 {dimension_numbers = #tpu.dot_dimension_numbers<[1], [0], [0], [1], [0, 0, 1, 1], [], []>} : vector<8x128xf32>, vector<128x256xf32>, vector<8x256xf32> -> vector<8x256xf32>
    %79 = vector.extract_strided_slice %78 {offsets = [0, 0], sizes = [8, 128], strides = [1, 1]} : vector<8x256xf32> to vector<8x128xf32>
    %80 = vector.extract_strided_slice %78 {offsets = [0, 128], sizes = [8, 128], strides = [1, 1]} : vector<8x256xf32> to vector<8x128xf32>
    %cst_34 = arith.constant dense<0xFF800000> : vector<128xf32>
    %81 = vector.multi_reduction <maximumf>, %79, %cst_34 [0] : vector<8x128xf32> to vector<128xf32>
    %82 = vector.shape_cast %81 : vector<128xf32> to vector<1x128xf32>
    %83 = vector.broadcast %82 : vector<1x128xf32> to vector<8x128xf32>
    %84 = arith.subf %79, %83 : vector<8x128xf32>
    %85 = math.exp %84 : vector<8x128xf32>
    %cst_35 = arith.constant dense<0.000000e+00> : vector<128xf32>
    %86 = vector.multi_reduction <add>, %85, %cst_35 [0] : vector<8x128xf32> to vector<128xf32>
    %87 = vector.shape_cast %86 : vector<128xf32> to vector<1x128xf32>
    %88 = tpu.reciprocal %87 {approx = true} : vector<1x128xf32> -> vector<1x128xf32>
    %89 = vector.broadcast %88 : vector<1x128xf32> to vector<8x128xf32>
    %90 = arith.mulf %85, %89 : vector<8x128xf32>
    %91 = arith.mulf %90, %77 : vector<8x128xf32>
    %cst_36 = arith.constant dense<0.000000e+00> : vector<128xf32>
    %92 = vector.multi_reduction <add>, %91, %cst_36 [0] : vector<8x128xf32> to vector<128xf32>
    %93 = vector.shape_cast %92 : vector<128xf32> to vector<1x128xf32>
    %cst_37 = arith.constant 0.000000e+00 : f32
    %94 = vector.broadcast %cst_37 : f32 to vector<1x128xf32>
    %95 = arith.subf %94, %93 : vector<1x128xf32>
    %96 = math.exp %95 : vector<1x128xf32>
    %cst_38 = arith.constant 1.000000e+00 : f32
    %97 = vector.broadcast %cst_38 : f32 to vector<1x128xf32>
    %98 = arith.addf %97, %96 : vector<1x128xf32>
    %cst_39 = arith.constant 1.000000e+00 : f32
    %99 = vector.broadcast %cst_39 : f32 to vector<1x128xf32>
    %100 = arith.divf %99, %98 : vector<1x128xf32>
    %101 = vector.shape_cast %100 : vector<1x128xf32> to vector<1x128xf32>
    %102 = vector.broadcast %101 : vector<1x128xf32> to vector<8x128xf32>
    %cst_40 = arith.constant dense<0.000000e+00> : vector<8x128xf32>
    %103 = tpu.matmul %102, %4, %cst_40 {dimension_numbers = #tpu.dot_dimension_numbers<[1], [0], [0], [1], [0, 0, 1, 1], [], []>} : vector<8x128xf32>, vector<128x128xf32>, vector<8x128xf32> -> vector<8x128xf32>
    %104 = arith.addf %80, %103 : vector<8x128xf32>
    %105 = arith.addf %104, %10 : vector<8x128xf32>
    %c0_41 = arith.constant 0 : index
    %c0_42 = arith.constant 0 : index
    %c0_43 = arith.constant 0 : index
    %106 = vector.load %arg8[%c0_41, %c0_42, %c0_43] : memref<1x8x128xf32, #tpu.memory_space<vmem>>, vector<1x8x128xf32>
    %107 = vector.shape_cast %106 : vector<1x8x128xf32> to vector<8x128xf32>
    %108 = vector.shape_cast %105 : vector<8x128xf32> to vector<1x8x128xf32>
    tpu.vector_store %arg8[%c0_41, %c0_42, %c0_43], %108 {strides = array<i32>} : memref<1x8x128xf32, #tpu.memory_space<vmem>>, vector<1x8x128xf32>,
    return
  }
  func.func @transform_0(%arg0: i32) -> (i32, i32, i32) {
    %c0_i32 = arith.constant 0 : i32
    %c0_i32_0 = arith.constant 0 : i32
    %c0_i32_1 = arith.constant 0 : i32
    return %arg0, %c0_i32, %c0_i32_0 : i32, i32, i32
  }
  func.func @transform_1(%arg0: i32) -> (i32, i32, i32) {
    %c0_i32 = arith.constant 0 : i32
    %c0_i32_0 = arith.constant 0 : i32
    %c0_i32_1 = arith.constant 0 : i32
    return %arg0, %c0_i32, %c0_i32_0 : i32, i32, i32
  }
  func.func @transform_2(%arg0: i32) -> (i32, i32) {
    %c0_i32 = arith.constant 0 : i32
    %c0_i32_0 = arith.constant 0 : i32
    %c0_i32_1 = arith.constant 0 : i32
    return %c0_i32, %c0_i32_0 : i32, i32
  }
  func.func @transform_3(%arg0: i32) -> (i32, i32) {
    %c0_i32 = arith.constant 0 : i32
    %c0_i32_0 = arith.constant 0 : i32
    %c0_i32_1 = arith.constant 0 : i32
    return %c0_i32, %c0_i32_0 : i32, i32
  }
  func.func @transform_4(%arg0: i32) -> (i32, i32) {
    %c0_i32 = arith.constant 0 : i32
    %c0_i32_0 = arith.constant 0 : i32
    %c0_i32_1 = arith.constant 0 : i32
    return %c0_i32, %c0_i32_0 : i32, i32
  }
  func.func @transform_5(%arg0: i32) -> (i32, i32) {
    %c0_i32 = arith.constant 0 : i32
    %c0_i32_0 = arith.constant 0 : i32
    %c0_i32_1 = arith.constant 0 : i32
    return %c0_i32, %c0_i32_0 : i32, i32
  }
  func.func @transform_6(%arg0: i32) -> (i32, i32) {
    %c0_i32 = arith.constant 0 : i32
    %c0_i32_0 = arith.constant 0 : i32
    %c0_i32_1 = arith.constant 0 : i32
    return %c0_i32, %c0_i32_0 : i32, i32
  }
  func.func @transform_7(%arg0: i32) -> (i32, i32, i32) {
    %c0_i32 = arith.constant 0 : i32
    %c0_i32_0 = arith.constant 0 : i32
    %c0_i32_1 = arith.constant 0 : i32
    return %arg0, %c0_i32, %c0_i32_0 : i32, i32, i32
  }
}

</mosaic_0001>

<llo_original>
// kernel: tpu_custom_call.1
$region0: #{tpu_custom_call.1}
  #allocation0 [shape = 'u32[]', space=smem, size = 0x4, offset = 0x4, fixed_abs, tag = 'smem constant byte address 0x4 - core index']
  #allocation1 [shape = 'u32[144,128]{1,0:T(1,128)}', space=vmem, size = 0x12000, scoped, tag = 'internal scratch']
  %s0 = inlined_call_operand.hbm [shape: f32[2,8,128], index: 0, kind: input, shape index: {}]
  %s1 = inlined_call_operand.hbm [shape: f32[2,8,128], index: 1, kind: input, shape index: {}]
  %s2 = inlined_call_operand.hbm [shape: f32[128,128], index: 2, kind: input, shape index: {}]
  %s3 = inlined_call_operand.vmem [shape: f32[1,128], index: 3, kind: input, shape index: {}]
  %s4 = inlined_call_operand.hbm [shape: f32[128,256], index: 4, kind: input, shape index: {}]
  %s5 = inlined_call_operand.hbm [shape: f32[128,128], index: 5, kind: input, shape index: {}]
  %s6 = inlined_call_operand.vmem [shape: f32[1,128], index: 6, kind: input, shape index: {}]
  %s7 = inlined_call_operand.hbm [shape: f32[2,8,128], index: 7, kind: output, shape index: {}]
  %s8 = sld [smem:[#allocation0]]
  $region81: #{tpu_custom_call.1} parent=0
    _
  %s10 = ssub.s32 1, %s8
  %s11 = scalar_select 0, %s10, %s8
  $region1: #{tpu_custom_call.1} parent=0
    #allocation2 [shape = 'u8[8192]{0}', space=vmem, size = 0x2000, scoped, tag = 'input window, operand 0']
    #allocation3 [shape = 's32[2]{0}', space=sflag, size = 0x8, scoped, tag = 'scoped memory for tpu_custom_call.1']
    #allocation4 [shape = 's32[2]{0}', space=sflag, size = 0x8, scoped, tag = 'scoped memory for tpu_custom_call.1']
    #allocation5 [shape = 'u8[8192]{0}', space=vmem, size = 0x2000, scoped, tag = 'input window, operand 1']
    #allocation6 [shape = 's32[2]{0}', space=sflag, size = 0x8, scoped, tag = 'scoped memory for tpu_custom_call.1']
    #allocation7 [shape = 'u8[65536]{0}', space=vmem, size = 0x10000, scoped, tag = 'input window, operand 2, single buffered']
    #allocation8 [shape = 'u8[131072]{0}', space=vmem, size = 0x20000, scoped, tag = 'input window, operand 4, single buffered']
    #allocation9 [shape = 's32[1]{0}', space=sflag, size = 0x4, scoped, tag = 'scoped memory for tpu_custom_call.1']
    #allocation10 [shape = 'u8[65536]{0}', space=vmem, size = 0x10000, scoped, tag = 'input window, operand 5, single buffered']
    #allocation11 [shape = 'u8[8192]{0}', space=vmem, size = 0x2000, scoped, tag = 'output window, operand 0']
    %12 = vsyncpa [#allocation3], 0
    %s13 = scalar_lea.sflag [#allocation3], 1
    %14 = vsyncpa %s13, 0
    %15 = vsyncpa [#allocation6], 0
    %s16 = scalar_lea.sflag [#allocation6], 1
    %17 = vsyncpa %s16, 0
    %18 = vsyncpa [#allocation9], 0
    %19 = vsyncpa [#allocation4], 0
    %s20 = scalar_lea.sflag [#allocation4], 1
    %21 = vsyncpa %s20, 0
    loop: start=0, step=1, limit=4
    $region2: #{tpu_custom_call.1} parent=1 // loop_pre_header
      _
    $region3: #{tpu_custom_call.1} parent=1 // loop_header
      %s23 = sphi 0, %s27
      %p24 = scmp.ge.s32.totalorder %s23, 4
      %s33 = sphi 0, %s35
      %s36 = sphi 0, %s33
      %s37 = sphi 0, %s36
      %s53 = sphi 0, %s37
      %s59 = sphi 0, %s61
      %s62 = sphi 0, %s59
      %s63 = sphi 0, %s62
      %s79 = sphi 0, %s63
      %s83 = sphi 0, %s83
      %s85 = sphi 0, %s83
      %s86 = sphi 0, %s85
      %s100 = sphi 0, %s86
      %s104 = sphi 0, %s104
      %s106 = sphi 0, %s104
      %s107 = sphi 0, %s106
      %s121 = sphi 0, %s107
      %s125 = sphi 0, %s125
      %s127 = sphi 0, %s125
      %s128 = sphi 0, %s127
      %s142 = sphi 0, %s128
      %s146 = sphi 0, %s146
      %s148 = sphi 0, %s146
      %s149 = sphi 0, %s148
      %s163 = sphi 0, %s149
      %s167 = sphi 0, %s167
      %s169 = sphi 0, %s167
      %s170 = sphi 0, %s169
      %s184 = sphi 0, %s170
      %s190 = sphi 0, %s192
      %s193 = sphi 0, %s190
      %s194 = sphi 0, %s193
      %s210 = sphi 0, %s194
    $region4: #{tpu_custom_call.1} parent=1 // loop_header_branch
      %26 = sbr.rel (%p24) target = $region8
    $region5: #{tpu_custom_call.1} parent=1 // loop_body
      %s28 = ssub.s32 %s23, 1
      %s29 = ssub.s32 %s23, 2
      %s30 = sadd.s32 %s23, 1
      %s31 = ssub.s32 %s23, %s30
      %p32 = scmp.eq.s32.totalorder %s31, 0
      %s34 = sadd.s32 %s33, 1
      %s35 = scalar_select %p32, %s33, %s34
      %p38 = pneg %p32
      %p39 = scmp.eq.s32.totalorder %s23, 1
      %p40 = por %p38, %p39
      %p41 = scmp.ne.s32.totalorder %s33, %s36
      %p42 = scmp.eq.s32.totalorder %s23, 0
      %p43 = por %p41, %p42
      %p44 = scmp.ne.s32.totalorder %s33, %s36
      %p45 = scmp.eq.s32.totalorder %s28, 1
      %p46 = por %p44, %p45
      %p47 = scmp.ne.s32.totalorder %s36, %s37
      %p48 = scmp.eq.s32.totalorder %s28, 0
      %p49 = por %p47, %p48
      %p50 = scmp.ne.s32.totalorder %s36, %s37
      %p51 = scmp.eq.s32.totalorder %s29, 1
      %p52 = por %p50, %p51
      %p54 = scmp.ne.s32.totalorder %s37, %s53
      %p55 = scmp.eq.s32.totalorder %s29, 0
      %p56 = por %p54, %p55
      %s57 = ssub.s32 %s23, %s30
      %p58 = scmp.eq.s32.totalorder %s57, 0
      %s60 = sadd.s32 %s59, 1
      %s61 = scalar_select %p58, %s59, %s60
      %p64 = pneg %p58
      %p65 = scmp.eq.s32.totalorder %s23, 1
      %p66 = por %p64, %p65
      %p67 = scmp.ne.s32.totalorder %s59, %s62
      %p68 = scmp.eq.s32.totalorder %s23, 0
      %p69 = por %p67, %p68
      %p70 = scmp.ne.s32.totalorder %s59, %s62
      %p71 = scmp.eq.s32.totalorder %s28, 1
      %p72 = por %p70, %p71
      %p73 = scmp.ne.s32.totalorder %s62, %s63
      %p74 = scmp.eq.s32.totalorder %s28, 0
      %p75 = por %p73, %p74
      %p76 = scmp.ne.s32.totalorder %s62, %s63
      %p77 = scmp.eq.s32.totalorder %s29, 1
      %p78 = por %p76, %p77
      %p80 = scmp.ne.s32.totalorder %s63, %s79
      %p81 = scmp.eq.s32.totalorder %s29, 0
      %p82 = por %p80, %p81
      %s84 = sadd.s32 %s83, 1
      %p87 = scmp.eq.s32.totalorder %s23, 1
      %p88 = scmp.ne.s32.totalorder %s83, %s85
      %p89 = scmp.eq.s32.totalorder %s23, 0
      %p90 = por %p88, %p89
      %p91 = scmp.ne.s32.totalorder %s83, %s85
      %p92 = scmp.eq.s32.totalorder %s28, 1
      %p93 = por %p91, %p92
      %p94 = scmp.ne.s32.totalorder %s85, %s86
      %p95 = scmp.eq.s32.totalorder %s28, 0
      %p96 = por %p94, %p95
      %p97 = scmp.ne.s32.totalorder %s85, %s86
      %p98 = scmp.eq.s32.totalorder %s29, 1
      %p99 = por %p97, %p98
      %p101 = scmp.ne.s32.totalorder %s86, %s100
      %p102 = scmp.eq.s32.totalorder %s29, 0
      %p103 = por %p101, %p102
      %s105 = sadd.s32 %s104, 1
      %p108 = scmp.eq.s32.totalorder %s23, 1
      %p109 = scmp.ne.s32.totalorder %s104, %s106
      %p110 = scmp.eq.s32.totalorder %s23, 0
      %p111 = por %p109, %p110
      %p112 = scmp.ne.s32.totalorder %s104, %s106
      %p113 = scmp.eq.s32.totalorder %s28, 1
      %p114 = por %p112, %p113
      %p115 = scmp.ne.s32.totalorder %s106, %s107
      %p116 = scmp.eq.s32.totalorder %s28, 0
      %p117 = por %p115, %p116
      %p118 = scmp.ne.s32.totalorder %s106, %s107
      %p119 = scmp.eq.s32.totalorder %s29, 1
      %p120 = por %p118, %p119
      %p122 = scmp.ne.s32.totalorder %s107, %s121
      %p123 = scmp.eq.s32.totalorder %s29, 0
      %p124 = por %p122, %p123
      %s126 = sadd.s32 %s125, 1
      %p129 = scmp.eq.s32.totalorder %s23, 1
      %p130 = scmp.ne.s32.totalorder %s125, %s127
      %p131 = scmp.eq.s32.totalorder %s23, 0
      %p132 = por %p130, %p131
      %p133 = scmp.ne.s32.totalorder %s125, %s127
      %p134 = scmp.eq.s32.totalorder %s28, 1
      %p135 = por %p133, %p134
      %p136 = scmp.ne.s32.totalorder %s127, %s128
      %p137 = scmp.eq.s32.totalorder %s28, 0
      %p138 = por %p136, %p137
      %p139 = scmp.ne.s32.totalorder %s127, %s128
      %p140 = scmp.eq.s32.totalorder %s29, 1
      %p141 = por %p139, %p140
      %p143 = scmp.ne.s32.totalorder %s128, %s142
      %p144 = scmp.eq.s32.totalorder %s29, 0
      %p145 = por %p143, %p144
      %s147 = sadd.s32 %s146, 1
      %p150 = scmp.eq.s32.totalorder %s23, 1
      %p151 = scmp.ne.s32.totalorder %s146, %s148
      %p152 = scmp.eq.s32.totalorder %s23, 0
      %p153 = por %p151, %p152
      %p154 = scmp.ne.s32.totalorder %s146, %s148
      %p155 = scmp.eq.s32.totalorder %s28, 1
      %p156 = por %p154, %p155
      %p157 = scmp.ne.s32.totalorder %s148, %s149
      %p158 = scmp.eq.s32.totalorder %s28, 0
      %p159 = por %p157, %p158
      %p160 = scmp.ne.s32.totalorder %s148, %s149
      %p161 = scmp.eq.s32.totalorder %s29, 1
      %p162 = por %p160, %p161
      %p164 = scmp.ne.s32.totalorder %s149, %s163
      %p165 = scmp.eq.s32.totalorder %s29, 0
      %p166 = por %p164, %p165
      %s168 = sadd.s32 %s167, 1
      %p171 = scmp.eq.s32.totalorder %s23, 1
      %p172 = scmp.ne.s32.totalorder %s167, %s169
      %p173 = scmp.eq.s32.totalorder %s23, 0
      %p174 = por %p172, %p173
      %p175 = scmp.ne.s32.totalorder %s167, %s169
      %p176 = scmp.eq.s32.totalorder %s28, 1
      %p177 = por %p175, %p176
      %p178 = scmp.ne.s32.totalorder %s169, %s170
      %p179 = scmp.eq.s32.totalorder %s28, 0
      %p180 = por %p178, %p179
      %p181 = scmp.ne.s32.totalorder %s169, %s170
      %p182 = scmp.eq.s32.totalorder %s29, 1
      %p183 = por %p181, %p182
      %p185 = scmp.ne.s32.totalorder %s170, %s184
      %p186 = scmp.eq.s32.totalorder %s29, 0
      %p187 = por %p185, %p186
      %s188 = ssub.s32 %s23, %s30
      %p189 = scmp.eq.s32.totalorder %s188, 0
      %s191 = sadd.s32 %s190, 1
      %s192 = scalar_select %p189, %s190, %s191
      %p195 = pneg %p189
      %p196 = scmp.eq.s32.totalorder %s23, 1
      %p197 = por %p195, %p196
      %p198 = scmp.ne.s32.totalorder %s190, %s193
      %p199 = scmp.eq.s32.totalorder %s23, 0
      %p200 = por %p198, %p199
      %p201 = scmp.ne.s32.totalorder %s190, %s193
      %p202 = scmp.eq.s32.totalorder %s28, 1
      %p203 = por %p201, %p202
      %p204 = scmp.ne.s32.totalorder %s193, %s194
      %p205 = scmp.eq.s32.totalorder %s28, 0
      %p206 = por %p204, %p205
      %p207 = scmp.ne.s32.totalorder %s193, %s194
      %p208 = scmp.eq.s32.totalorder %s29, 1
      %p209 = por %p207, %p208
      %p211 = scmp.ne.s32.totalorder %s194, %s210
      %p212 = scmp.eq.s32.totalorder %s29, 0
      %p213 = por %p211, %p212
      %p214 = scmp.le.s32.totalorder 1, %s23
      %p215 = scmp.lt.s32.totalorder %s23, 3
      %p216 = pnand %p214, %p215
      %p217 = pneg %p216
      // Predicated region
      $region9: #{tpu_custom_call.1} parent=5 // pred_check
        _
      $region10: #{tpu_custom_call.1} parent=5 // pred_check_branch
        %219 = sbr.rel (%p216) target = $region12
      $region11: #{tpu_custom_call.1} parent=5 // pred_region
        %s220 = ssub.s32 %s23, 1
        // Predicated region
        $region13: #{tpu_custom_call.1} parent=11 // pred_check
          %p221 = pneg %p96
        $region14: #{tpu_custom_call.1} parent=11 // pred_check_branch
          %223 = sbr.rel (%p221) target = $region16
        $region15: #{tpu_custom_call.1} parent=11 // pred_region
          %s225 = ssub.s32 2048, 2048
          %226 = vsyncadd [#allocation6], %s225
          %s227 = sshll.u32 [#allocation7], 4
          %s228 = int_to_ptr.vmem [resolvable:$true] %s227
          %233 = dma.hbm_to_vmem [thread:$0]  %s2, 2048, %s228, [#allocation6], 128, 128, 8
        $region16: #{tpu_custom_call.1} parent=11 // pred_fallthru
          _
        // Predicated region
        $region17: #{tpu_custom_call.1} parent=11 // pred_check
          %p234 = pneg %p117
        $region18: #{tpu_custom_call.1} parent=11 // pred_check_branch
          %236 = sbr.rel (%p234) target = $region20
        $region19: #{tpu_custom_call.1} parent=11 // pred_region
          _
        $region20: #{tpu_custom_call.1} parent=11 // pred_fallthru
          _
        // Predicated region
        $region21: #{tpu_custom_call.1} parent=11 // pred_check
          %p237 = pneg %p138
        $region22: #{tpu_custom_call.1} parent=11 // pred_check_branch
          %239 = sbr.rel (%p237) target = $region24
        $region23: #{tpu_custom_call.1} parent=11 // pred_region
          %s241 = ssub.s32 4096, 4096
          %242 = vsyncadd [#allocation9], %s241
          %s243 = sshll.u32 [#allocation8], 4
          %s244 = int_to_ptr.vmem [resolvable:$true] %s243
          %249 = dma.hbm_to_vmem [thread:$0]  %s4, 4096, %s244, [#allocation9], 256, 256, 16
        $region24: #{tpu_custom_call.1} parent=11 // pred_fallthru
          _
        // Predicated region
        $region25: #{tpu_custom_call.1} parent=11 // pred_check
          %p250 = pneg %p159
        $region26: #{tpu_custom_call.1} parent=11 // pred_check_branch
          %252 = sbr.rel (%p250) target = $region28
        $region27: #{tpu_custom_call.1} parent=11 // pred_region
          %s254 = ssub.s32 2048, 2048
          %255 = vsyncadd [#allocation9], %s254
          %s256 = sshll.u32 [#allocation10], 4
          %s257 = int_to_ptr.vmem [resolvable:$true] %s256
          %262 = dma.hbm_to_vmem [thread:$0]  %s5, 2048, %s257, [#allocation9], 128, 128, 8
        $region28: #{tpu_custom_call.1} parent=11 // pred_fallthru
          _
        // Predicated region
        $region29: #{tpu_custom_call.1} parent=11 // pred_check
          %p263 = pneg %p180
        $region30: #{tpu_custom_call.1} parent=11 // pred_check_branch
          %265 = sbr.rel (%p263) target = $region32
        $region31: #{tpu_custom_call.1} parent=11 // pred_region
          _
        $region32: #{tpu_custom_call.1} parent=11 // pred_fallthru
          _
      $region12: #{tpu_custom_call.1} parent=5 // pred_fallthru
        _
      %p266 = scmp.lt.s32.totalorder %s23, 2
      // Predicated region
      $region33: #{tpu_custom_call.1} parent=5 // pred_check
        %p267 = pneg %p266
      $region34: #{tpu_custom_call.1} parent=5 // pred_check_branch
        %269 = sbr.rel (%p267) target = $region36
      $region35: #{tpu_custom_call.1} parent=5 // pred_region
        // Predicated region
        $region37: #{tpu_custom_call.1} parent=35 // pred_check
          %p270 = pneg %p43
        $region38: #{tpu_custom_call.1} parent=35 // pred_check_branch
          %272 = sbr.rel (%p270) target = $region40
        $region39: #{tpu_custom_call.1} parent=35 // pred_region
          %s273 = sand.u32 %s33, 1
          %s274 = scalar_lea.sflag [#allocation3], %s273
          %s275 = sand.u32 %s33, 1
          %s276 = smul.addr %s275, 8
          %s277 = scalar_lea.vmem [#allocation2], %s276
          %s279 = ssub.s32 128, 128
          %280 = vsyncadd %s274, %s279
          %s281 = smul.addr %s23, 128
          %s282 = scalar_lea.hbm %s0, %s281
          %s284 = sshll.u32 %s277, 4
          %s285 = int_to_ptr.vmem [resolvable:$true] %s284
          %287 = dma.hbm_to_vmem [thread:$0]  %s282, 128, %s285, %s274
        $region40: #{tpu_custom_call.1} parent=35 // pred_fallthru
          _
        // Predicated region
        $region41: #{tpu_custom_call.1} parent=35 // pred_check
          %p288 = pneg %p69
        $region42: #{tpu_custom_call.1} parent=35 // pred_check_branch
          %290 = sbr.rel (%p288) target = $region44
        $region43: #{tpu_custom_call.1} parent=35 // pred_region
          %s291 = sand.u32 %s23, 1
          %s292 = scalar_lea.sflag [#allocation6], %s291
          %s293 = sand.u32 %s59, 1
          %s294 = smul.addr %s293, 8
          %s295 = scalar_lea.vmem [#allocation5], %s294
          %s297 = ssub.s32 128, 128
          %298 = vsyncadd %s292, %s297
          %s299 = smul.addr %s23, 128
          %s300 = scalar_lea.hbm %s1, %s299
          %s302 = sshll.u32 %s295, 4
          %s303 = int_to_ptr.vmem [resolvable:$true] %s302
          %305 = dma.hbm_to_vmem [thread:$0]  %s300, 128, %s303, %s292
        $region44: #{tpu_custom_call.1} parent=35 // pred_fallthru
          _
      $region36: #{tpu_custom_call.1} parent=5 // pred_fallthru
        _
      %p306 = scmp.le.s32.totalorder 1, %s23
      %p307 = scmp.lt.s32.totalorder %s23, 3
      %p308 = pnand %p306, %p307
      %p309 = pneg %p308
      // Predicated region
      $region45: #{tpu_custom_call.1} parent=5 // pred_check
        _
      $region46: #{tpu_custom_call.1} parent=5 // pred_check_branch
        %311 = sbr.rel (%p308) target = $region48
      $region47: #{tpu_custom_call.1} parent=5 // pred_region
        %s312 = ssub.s32 %s23, 1
        %s313 = sand.u32 %s36, 1
        %s314 = scalar_lea.sflag [#allocation3], %s313
        %s315 = sand.u32 %s36, 1
        %s316 = smul.addr %s315, 8
        %s317 = scalar_lea.vmem [#allocation2], %s316
        // Predicated region
        $region49: #{tpu_custom_call.1} parent=47 // pred_check
          %p318 = pneg %p49
        $region50: #{tpu_custom_call.1} parent=47 // pred_check_branch
          %320 = sbr.rel (%p318) target = $region52
        $region51: #{tpu_custom_call.1} parent=47 // pred_region
          %321 = dma.done %s314, 128
        $region52: #{tpu_custom_call.1} parent=47 // pred_fallthru
          _
        %s322 = sand.u32 %s28, 1
        %s323 = scalar_lea.sflag [#allocation6], %s322
        %s324 = sand.u32 %s62, 1
        %s325 = smul.addr %s324, 8
        %s326 = scalar_lea.vmem [#allocation5], %s325
        // Predicated region
        $region53: #{tpu_custom_call.1} parent=47 // pred_check
          %p327 = pneg %p75
        $region54: #{tpu_custom_call.1} parent=47 // pred_check_branch
          %329 = sbr.rel (%p327) target = $region56
        $region55: #{tpu_custom_call.1} parent=47 // pred_region
          %330 = dma.done %s323, 128
        $region56: #{tpu_custom_call.1} parent=47 // pred_fallthru
          _
        // Predicated region
        $region57: #{tpu_custom_call.1} parent=47 // pred_check
          %p331 = pneg %p96
        $region58: #{tpu_custom_call.1} parent=47 // pred_check_branch
          %333 = sbr.rel (%p331) target = $region60
        $region59: #{tpu_custom_call.1} parent=47 // pred_region
          %334 = dma.done [#allocation6], 2048
        $region60: #{tpu_custom_call.1} parent=47 // pred_fallthru
          _
        // Predicated region
        $region61: #{tpu_custom_call.1} parent=47 // pred_check
          %p335 = pneg %p138
        $region62: #{tpu_custom_call.1} parent=47 // pred_check_branch
          %337 = sbr.rel (%p335) target = $region64
        $region63: #{tpu_custom_call.1} parent=47 // pred_region
          %338 = dma.done [#allocation9], 4096
        $region64: #{tpu_custom_call.1} parent=47 // pred_fallthru
          _
        // Predicated region
        $region65: #{tpu_custom_call.1} parent=47 // pred_check
          %p339 = pneg %p159
        $region66: #{tpu_custom_call.1} parent=47 // pred_check_branch
          %341 = sbr.rel (%p339) target = $region68
        $region67: #{tpu_custom_call.1} parent=47 // pred_region
          %342 = dma.done [#allocation9], 2048
        $region68: #{tpu_custom_call.1} parent=47 // pred_fallthru
          _
        %s343 = sand.u32 %s36, 1
        %s344 = scalar_lea.sflag [#allocation3], %s343
        %s345 = sand.u32 %s36, 1
        %s346 = smul.addr %s345, 8
        %s347 = scalar_lea.vmem [#allocation2], %s346
        %p348 = pneg %p49
        %p349 = pneg %p46
        %s350 = sand.u32 %s28, 1
        %s351 = scalar_lea.sflag [#allocation6], %s350
        %s352 = sand.u32 %s62, 1
        %s353 = smul.addr %s352, 8
        %s354 = scalar_lea.vmem [#allocation5], %s353
        %p355 = pneg %p75
        %p356 = pneg %p72
        %p357 = pneg %p96
        %p358 = pneg %p93
        %p359 = pneg %p117
        %p360 = pneg %p114
        %p361 = pneg %p138
        %p362 = pneg %p135
        %p363 = pneg %p159
        %p364 = pneg %p156
        %p365 = pneg %p180
        %p366 = pneg %p177
        %p367 = pneg %p206
        %p368 = pneg %p203
        %s369 = sand.u32 %s193, 1
        %s370 = scalar_lea.sflag [#allocation4], %s369
        %s371 = sand.u32 %s193, 1
        %s372 = smul.addr %s371, 8
        %s373 = scalar_lea.vmem [#allocation11], %s372
        %v374 = vld [vmem:[%s326] sm:$0xff]
        %v375 = vld [vmem:[#allocation7] sm:$0xff]
        %v376 = vld [vmem:[#allocation7 + $0x8] sm:$0xff]
        %v377 = vld [vmem:[#allocation7 + $0x10] sm:$0xff]
        %v378 = vld [vmem:[#allocation7 + $0x18] sm:$0xff]
        %v379 = vld [vmem:[#allocation7 + $0x20] sm:$0xff]
        %v380 = vld [vmem:[#allocation7 + $0x28] sm:$0xff]
        %v381 = vld [vmem:[#allocation7 + $0x30] sm:$0xff]
        %v382 = vld [vmem:[#allocation7 + $0x38] sm:$0xff]
        %v383 = vld [vmem:[#allocation7 + $0x40] sm:$0xff]
        %v384 = vld [vmem:[#allocation7 + $0x48] sm:$0xff]
        %v385 = vld [vmem:[#allocation7 + $0x50] sm:$0xff]
        %v386 = vld [vmem:[#allocation7 + $0x58] sm:$0xff]
        %v387 = vld [vmem:[#allocation7 + $0x60] sm:$0xff]
        %v388 = vld [vmem:[#allocation7 + $0x68] sm:$0xff]
        %v389 = vld [vmem:[#allocation7 + $0x70] sm:$0xff]
        %v390 = vld [vmem:[#allocation7 + $0x78] sm:$0xff]
        %v391 = vld [vmem:[#allocation8] sm:$0xff]
        %v392 = vld [vmem:[#allocation8 + $0x8] sm:$0xff]
        %v393 = vld [vmem:[#allocation8 + $0x10] sm:$0xff]
        %v394 = vld [vmem:[#allocation8 + $0x18] sm:$0xff]
        %v395 = vld [vmem:[#allocation8 + $0x20] sm:$0xff]
        %v396 = vld [vmem:[#allocation8 + $0x28] sm:$0xff]
        %v397 = vld [vmem:[#allocation8 + $0x30] sm:$0xff]
        %v398 = vld [vmem:[#allocation8 + $0x38] sm:$0xff]
        %v399 = vld [vmem:[#allocation8 + $0x40] sm:$0xff]
        %v400 = vld [vmem:[#allocation8 + $0x48] sm:$0xff]
        %v401 = vld [vmem:[#allocation8 + $0x50] sm:$0xff]
        %v402 = vld [vmem:[#allocation8 + $0x58] sm:$0xff]
        %v403 = vld [vmem:[#allocation8 + $0x60] sm:$0xff]
        %v404 = vld [vmem:[#allocation8 + $0x68] sm:$0xff]
        %v405 = vld [vmem:[#allocation8 + $0x70] sm:$0xff]
        %v406 = vld [vmem:[#allocation8 + $0x78] sm:$0xff]
        %v407 = vld [vmem:[#allocation8 + $0x80] sm:$0xff]
        %v408 = vld [vmem:[#allocation8 + $0x88] sm:$0xff]
        %v409 = vld [vmem:[#allocation8 + $0x90] sm:$0xff]
        %v410 = vld [vmem:[#allocation8 + $0x98] sm:$0xff]
        %v411 = vld [vmem:[#allocation8 + $0xa0] sm:$0xff]
        %v412 = vld [vmem:[#allocation8 + $0xa8] sm:$0xff]
        %v413 = vld [vmem:[#allocation8 + $0xb0] sm:$0xff]
        %v414 = vld [vmem:[#allocation8 + $0xb8] sm:$0xff]
        %v415 = vld [vmem:[#allocation8 + $0xc0] sm:$0xff]
        %v416 = vld [vmem:[#allocation8 + $0xc8] sm:$0xff]
        %v417 = vld [vmem:[#allocation8 + $0xd0] sm:$0xff]
        %v418 = vld [vmem:[#allocation8 + $0xd8] sm:$0xff]
        %v419 = vld [vmem:[#allocation8 + $0xe0] sm:$0xff]
        %v420 = vld [vmem:[#allocation8 + $0xe8] sm:$0xff]
        %v421 = vld [vmem:[#allocation8 + $0xf0] sm:$0xff]
        %v422 = vld [vmem:[#allocation8 + $0xf8] sm:$0xff]
        %v423 = vld [vmem:[#allocation10] sm:$0xff]
        %v424 = vld [vmem:[#allocation10 + $0x8] sm:$0xff]
        %v425 = vld [vmem:[#allocation10 + $0x10] sm:$0xff]
        %v426 = vld [vmem:[#allocation10 + $0x18] sm:$0xff]
        %v427 = vld [vmem:[#allocation10 + $0x20] sm:$0xff]
        %v428 = vld [vmem:[#allocation10 + $0x28] sm:$0xff]
        %v429 = vld [vmem:[#allocation10 + $0x30] sm:$0xff]
        %v430 = vld [vmem:[#allocation10 + $0x38] sm:$0xff]
        %v431 = vld [vmem:[#allocation10 + $0x40] sm:$0xff]
        %v432 = vld [vmem:[#allocation10 + $0x48] sm:$0xff]
        %v433 = vld [vmem:[#allocation10 + $0x50] sm:$0xff]
        %v434 = vld [vmem:[#allocation10 + $0x58] sm:$0xff]
        %v435 = vld [vmem:[#allocation10 + $0x60] sm:$0xff]
        %v436 = vld [vmem:[#allocation10 + $0x68] sm:$0xff]
        %v437 = vld [vmem:[#allocation10 + $0x70] sm:$0xff]
        %v438 = vld [vmem:[#allocation10 + $0x78] sm:$0xff]
        %v439 = vld [vmem:[%s3] sm:$0x1]
        %v441 = vlaneseq
        %v442 = vshrl.u32 %v441, 7
        %v443 = vsub.s32 0, %v442
        %v444 = vrot.slane %v439, %v443
        %v446 = vld [vmem:[%s6] sm:$0x1]
        %v448 = vlaneseq
        %v449 = vshrl.u32 %v448, 7
        %v450 = vsub.s32 0, %v449
        %v451 = vrot.slane %v446, %v450
        %v453 = vld [vmem:[%s317] sm:$0xff]
        %v454 = vmul.f32 %v453, %v374
        %455 = vmatprep.subr.mxu0 0.0
        %456 = vmatpush1.msra.mxu0 %v375
        %457 = vmatprep.subr.mxu0 0.0
        %458 = vmatpush1.msra.mxu0 %v376
        %459 = vmatprep.subr.mxu0 0.0
        %460 = vmatpush1.msra.mxu0 %v377
        %461 = vmatprep.subr.mxu0 0.0
        %462 = vmatpush1.msra.mxu0 %v378
        %463 = vmatprep.subr.mxu0 0.0
        %464 = vmatpush1.msra.mxu0 %v379
        %465 = vmatprep.subr.mxu0 0.0
        %466 = vmatpush1.msra.mxu0 %v380
        %467 = vmatprep.subr.mxu0 0.0
        %468 = vmatpush1.msra.mxu0 %v381
        %469 = vmatprep.subr.mxu0 0.0
        %470 = vmatpush1.msra.mxu0 %v382
        %471 = vmatprep.subr.mxu0 0.0
        %472 = vmatpush1.msra.mxu0 %v383
        %473 = vmatprep.subr.mxu0 0.0
        %474 = vmatpush1.msra.mxu0 %v384
        %475 = vmatprep.subr.mxu0 0.0
        %476 = vmatpush1.msra.mxu0 %v385
        %477 = vmatprep.subr.mxu0 0.0
        %478 = vmatpush1.msra.mxu0 %v386
        %479 = vmatprep.subr.mxu0 0.0
        %480 = vmatpush1.msra.mxu0 %v387
        %481 = vmatprep.subr.mxu0 0.0
        %482 = vmatpush1.msra.mxu0 %v388
        %483 = vmatprep.subr.mxu0 0.0
        %484 = vmatpush1.msra.mxu0 %v389
        %485 = vmatprep.subr.mxu0 0.0
        %486 = vmatpush1.msra.mxu0 %v390
        %487 = vmatprep.subr.mxu0 0.0
        %488 = vmatpush1.msra.mxu0 0.0
        %489 = vmatprep.subr.mxu0 0.0
        %490 = vmatpush1.msra.mxu0 0.0
        %491 = vmatprep.subr.mxu0 0.0
        %492 = vmatpush1.msra.mxu0 0.0
        %493 = vmatprep.subr.mxu0 0.0
        %494 = vmatpush1.msra.mxu0 0.0
        %495 = vmatprep.subr.mxu0 0.0
        %496 = vmatpush1.msra.mxu0 0.0
        %497 = vmatprep.subr.mxu0 0.0
        %498 = vmatpush1.msra.mxu0 0.0
        %499 = vmatprep.subr.mxu0 0.0
        %500 = vmatpush1.msra.mxu0 0.0
        %501 = vmatprep.subr.mxu0 0.0
        %502 = vmatpush1.msra.mxu0 0.0
        %503 = vmatprep.subr.mxu0 0.0
        %504 = vmatpush1.msra.mxu0 0.0
        %505 = vmatprep.subr.mxu0 0.0
        %506 = vmatpush1.msra.mxu0 0.0
        %507 = vmatprep.subr.mxu0 0.0
        %508 = vmatpush1.msra.mxu0 0.0
        %509 = vmatprep.subr.mxu0 0.0
        %510 = vmatpush1.msra.mxu0 0.0
        %511 = vmatprep.subr.mxu0 0.0
        %512 = vmatpush1.msra.mxu0 0.0
        %513 = vmatprep.subr.mxu0 0.0
        %514 = vmatpush1.msra.mxu0 0.0
        %515 = vmatprep.subr.mxu0 0.0
        %516 = vmatpush1.msra.mxu0 0.0
        %517 = vmatprep.subr.mxu0 0.0
        %518 = vmatpush1.msra.mxu0 0.0
        %519 = vmatprep.mubr.f32.mxu0 0.0
        %520 = vmatmul.mubr.f32.gmra.mrb[0].mxu0 %v454
        %v521 = vpop.f32.mrb[0].mxu0
        %v522 = vadd.f32 %v444, %v521
        %v523 = vpop.f32.mrb[0].mxu0
        %524 = vdwg.mxu0
        %525 = vmatprep.subr.mxu0 %v392
        %526 = vmatpush1.msra.mxu0 %v391
        %527 = vmatprep.subr.mxu0 %v394
        %528 = vmatpush1.msra.mxu0 %v393
        %529 = vmatprep.subr.mxu0 %v396
        %530 = vmatpush1.msra.mxu0 %v395
        %531 = vmatprep.subr.mxu0 %v398
        %532 = vmatpush1.msra.mxu0 %v397
        %533 = vmatprep.subr.mxu0 %v400
        %534 = vmatpush1.msra.mxu0 %v399
        %535 = vmatprep.subr.mxu0 %v402
        %536 = vmatpush1.msra.mxu0 %v401
        %537 = vmatprep.subr.mxu0 %v404
        %538 = vmatpush1.msra.mxu0 %v403
        %539 = vmatprep.subr.mxu0 %v406
        %540 = vmatpush1.msra.mxu0 %v405
        %541 = vmatprep.subr.mxu0 %v408
        %542 = vmatpush1.msra.mxu0 %v407
        %543 = vmatprep.subr.mxu0 %v410
        %544 = vmatpush1.msra.mxu0 %v409
        %545 = vmatprep.subr.mxu0 %v412
        %546 = vmatpush1.msra.mxu0 %v411
        %547 = vmatprep.subr.mxu0 %v414
        %548 = vmatpush1.msra.mxu0 %v413
        %549 = vmatprep.subr.mxu0 %v416
        %550 = vmatpush1.msra.mxu0 %v415
        %551 = vmatprep.subr.mxu0 %v418
        %552 = vmatpush1.msra.mxu0 %v417
        %553 = vmatprep.subr.mxu0 %v420
        %554 = vmatpush1.msra.mxu0 %v419
        %555 = vmatprep.subr.mxu0 %v422
        %556 = vmatpush1.msra.mxu0 %v421
        %557 = vmatprep.subr.mxu0 0.0
        %558 = vmatpush1.msra.mxu0 0.0
        %559 = vmatprep.subr.mxu0 0.0
        %560 = vmatpush1.msra.mxu0 0.0
        %561 = vmatprep.subr.mxu0 0.0
        %562 = vmatpush1.msra.mxu0 0.0
        %563 = vmatprep.subr.mxu0 0.0
        %564 = vmatpush1.msra.mxu0 0.0
        %565 = vmatprep.subr.mxu0 0.0
        %566 = vmatpush1.msra.mxu0 0.0
        %567 = vmatprep.subr.mxu0 0.0
        %568 = vmatpush1.msra.mxu0 0.0
        %569 = vmatprep.subr.mxu0 0.0
        %570 = vmatpush1.msra.mxu0 0.0
        %571 = vmatprep.subr.mxu0 0.0
        %572 = vmatpush1.msra.mxu0 0.0
        %573 = vmatprep.subr.mxu0 0.0
        %574 = vmatpush1.msra.mxu0 0.0
        %575 = vmatprep.subr.mxu0 0.0
        %576 = vmatpush1.msra.mxu0 0.0
        %577 = vmatprep.subr.mxu0 0.0
        %578 = vmatpush1.msra.mxu0 0.0
        %579 = vmatprep.subr.mxu0 0.0
        %580 = vmatpush1.msra.mxu0 0.0
        %581 = vmatprep.subr.mxu0 0.0
        %582 = vmatpush1.msra.mxu0 0.0
        %583 = vmatprep.subr.mxu0 0.0
        %584 = vmatpush1.msra.mxu0 0.0
        %585 = vmatprep.subr.mxu0 0.0
        %586 = vmatpush1.msra.mxu0 0.0
        %587 = vmatprep.subr.mxu0 0.0
        %588 = vmatpush1.msra.mxu0 0.0
        %589 = vmatprep.mubr.f32.mxu0 0.0
        %590 = vmatmul.mubr.f32.gmra.mrb[0].mxu0 %v522
        %v591 = vpop.f32.mrb[0].mxu0
        %v592 = vadd.f32 0.0, %v591
        %v593 = vpop.f32.mrb[0].mxu0
        %v594 = vadd.f32 0.0, %v593
        %595 = vdwg.mxu0
        %v596 = vrot.slane %v592, 4
        %v597 = vmax.f32 %v592, %v596
        %v598 = vrot.slane %v597, 2
        %v599 = vmax.f32 %v597, %v598
        %v600 = vrot.slane %v599, 1
        %v601 = vmax.f32 %v599, %v600
        %v602 = vsub.f32 %v592, %v601
        %v603 = vmul.f32 %v602, 1.442695
        %v604 = vpow.pop %v603
        %v605 = vrot.slane %v604, 4
        %v606 = vadd.f32 %v604, %v605
        %v607 = vrot.slane %v606, 2
        %v608 = vadd.f32 %v606, %v607
        %v609 = vrot.slane %v608, 1
        %v610 = vadd.f32 %v608, %v609
        %v611 = vrcp.pop %v610
        %v612 = vmul.f32 %v604, %v611
        %v613 = vmul.f32 %v612, %v522
        %v614 = vrot.slane %v613, 4
        %v615 = vadd.f32 %v613, %v614
        %v616 = vrot.slane %v615, 2
        %v617 = vadd.f32 %v615, %v616
        %v618 = vrot.slane %v617, 1
        %v619 = vadd.f32 %v617, %v618
        %v620 = vsub.f32 0.0, %v619
        %v621 = vmul.f32 %v620, 1.442695
        %v622 = vpow.pop %v621
        %v623 = vadd.f32 %v622, 1.0
        %v624 = vrcp.pop %v623
        %v625 = vmul.f32 1.0, %v624
        %626 = vmatprep.subr.mxu0 0.0
        %627 = vmatpush1.msra.mxu0 %v423
        %628 = vmatprep.subr.mxu0 0.0
        %629 = vmatpush1.msra.mxu0 %v424
        %630 = vmatprep.subr.mxu0 0.0
        %631 = vmatpush1.msra.mxu0 %v425
        %632 = vmatprep.subr.mxu0 0.0
        %633 = vmatpush1.msra.mxu0 %v426
        %634 = vmatprep.subr.mxu0 0.0
        %635 = vmatpush1.msra.mxu0 %v427
        %636 = vmatprep.subr.mxu0 0.0
        %637 = vmatpush1.msra.mxu0 %v428
        %638 = vmatprep.subr.mxu0 0.0
        %639 = vmatpush1.msra.mxu0 %v429
        %640 = vmatprep.subr.mxu0 0.0
        %641 = vmatpush1.msra.mxu0 %v430
        %642 = vmatprep.subr.mxu0 0.0
        %643 = vmatpush1.msra.mxu0 %v431
        %644 = vmatprep.subr.mxu0 0.0
        %645 = vmatpush1.msra.mxu0 %v432
        %646 = vmatprep.subr.mxu0 0.0
        %647 = vmatpush1.msra.mxu0 %v433
        %648 = vmatprep.subr.mxu0 0.0
        %649 = vmatpush1.msra.mxu0 %v434
        %650 = vmatprep.subr.mxu0 0.0
        %651 = vmatpush1.msra.mxu0 %v435
        %652 = vmatprep.subr.mxu0 0.0
        %653 = vmatpush1.msra.mxu0 %v436
        %654 = vmatprep.subr.mxu0 0.0
        %655 = vmatpush1.msra.mxu0 %v437
        %656 = vmatprep.subr.mxu0 0.0
        %657 = vmatpush1.msra.mxu0 %v438
        %658 = vmatprep.subr.mxu0 0.0
        %659 = vmatpush1.msra.mxu0 0.0
        %660 = vmatprep.subr.mxu0 0.0
        %661 = vmatpush1.msra.mxu0 0.0
        %662 = vmatprep.subr.mxu0 0.0
        %663 = vmatpush1.msra.mxu0 0.0
        %664 = vmatprep.subr.mxu0 0.0
        %665 = vmatpush1.msra.mxu0 0.0
        %666 = vmatprep.subr.mxu0 0.0
        %667 = vmatpush1.msra.mxu0 0.0
        %668 = vmatprep.subr.mxu0 0.0
        %669 = vmatpush1.msra.mxu0 0.0
        %670 = vmatprep.subr.mxu0 0.0
        %671 = vmatpush1.msra.mxu0 0.0
        %672 = vmatprep.subr.mxu0 0.0
        %673 = vmatpush1.msra.mxu0 0.0
        %674 = vmatprep.subr.mxu0 0.0
        %675 = vmatpush1.msra.mxu0 0.0
        %676 = vmatprep.subr.mxu0 0.0
        %677 = vmatpush1.msra.mxu0 0.0
        %678 = vmatprep.subr.mxu0 0.0
        %679 = vmatpush1.msra.mxu0 0.0
        %680 = vmatprep.subr.mxu0 0.0
        %681 = vmatpush1.msra.mxu0 0.0
        %682 = vmatprep.subr.mxu0 0.0
        %683 = vmatpush1.msra.mxu0 0.0
        %684 = vmatprep.subr.mxu0 0.0
        %685 = vmatpush1.msra.mxu0 0.0
        %686 = vmatprep.subr.mxu0 0.0
        %687 = vmatpush1.msra.mxu0 0.0
        %688 = vmatprep.subr.mxu0 0.0
        %689 = vmatpush1.msra.mxu0 0.0
        %690 = vmatprep.mubr.f32.mxu0 0.0
        %691 = vmatmul.mubr.f32.gmra.mrb[0].mxu0 %v625
        %v692 = vpop.f32.mrb[0].mxu0
        %v693 = vadd.f32 0.0, %v692
        %v694 = vpop.f32.mrb[0].mxu0
        %695 = vdwg.mxu0
        %v696 = vadd.f32 %v594, %v693
        %v697 = vadd.f32 %v696, %v451
        %v698 = vmul.f32 %v697, %v374
        %699 = vmatprep.subr.mxu0 0.0
        %700 = vmatpush1.msra.mxu0 %v375
        %701 = vmatprep.subr.mxu0 0.0
        %702 = vmatpush1.msra.mxu0 %v376
        %703 = vmatprep.subr.mxu0 0.0
        %704 = vmatpush1.msra.mxu0 %v377
        %705 = vmatprep.subr.mxu0 0.0
        %706 = vmatpush1.msra.mxu0 %v378
        %707 = vmatprep.subr.mxu0 0.0
        %708 = vmatpush1.msra.mxu0 %v379
        %709 = vmatprep.subr.mxu0 0.0
        %710 = vmatpush1.msra.mxu0 %v380
        %711 = vmatprep.subr.mxu0 0.0
        %712 = vmatpush1.msra.mxu0 %v381
        %713 = vmatprep.subr.mxu0 0.0
        %714 = vmatpush1.msra.mxu0 %v382
        %715 = vmatprep.subr.mxu0 0.0
        %716 = vmatpush1.msra.mxu0 %v383
        %717 = vmatprep.subr.mxu0 0.0
        %718 = vmatpush1.msra.mxu0 %v384
        %719 = vmatprep.subr.mxu0 0.0
        %720 = vmatpush1.msra.mxu0 %v385
        %721 = vmatprep.subr.mxu0 0.0
        %722 = vmatpush1.msra.mxu0 %v386
        %723 = vmatprep.subr.mxu0 0.0
        %724 = vmatpush1.msra.mxu0 %v387
        %725 = vmatprep.subr.mxu0 0.0
        %726 = vmatpush1.msra.mxu0 %v388
        %727 = vmatprep.subr.mxu0 0.0
        %728 = vmatpush1.msra.mxu0 %v389
        %729 = vmatprep.subr.mxu0 0.0
        %730 = vmatpush1.msra.mxu0 %v390
        %731 = vmatprep.subr.mxu0 0.0
        %732 = vmatpush1.msra.mxu0 0.0
        %733 = vmatprep.subr.mxu0 0.0
        %734 = vmatpush1.msra.mxu0 0.0
        %735 = vmatprep.subr.mxu0 0.0
        %736 = vmatpush1.msra.mxu0 0.0
        %737 = vmatprep.subr.mxu0 0.0
        %738 = vmatpush1.msra.mxu0 0.0
        %739 = vmatprep.subr.mxu0 0.0
        %740 = vmatpush1.msra.mxu0 0.0
        %741 = vmatprep.subr.mxu0 0.0
        %742 = vmatpush1.msra.mxu0 0.0
        %743 = vmatprep.subr.mxu0 0.0
        %744 = vmatpush1.msra.mxu0 0.0
        %745 = vmatprep.subr.mxu0 0.0
        %746 = vmatpush1.msra.mxu0 0.0
        %747 = vmatprep.subr.mxu0 0.0
        %748 = vmatpush1.msra.mxu0 0.0
        %749 = vmatprep.subr.mxu0 0.0
        %750 = vmatpush1.msra.mxu0 0.0
        %751 = vmatprep.subr.mxu0 0.0
        %752 = vmatpush1.msra.mxu0 0.0
        %753 = vmatprep.subr.mxu0 0.0
        %754 = vmatpush1.msra.mxu0 0.0
        %755 = vmatprep.subr.mxu0 0.0
        %756 = vmatpush1.msra.mxu0 0.0
        %757 = vmatprep.subr.mxu0 0.0
        %758 = vmatpush1.msra.mxu0 0.0
        %759 = vmatprep.subr.mxu0 0.0
        %760 = vmatpush1.msra.mxu0 0.0
        %761 = vmatprep.subr.mxu0 0.0
        %762 = vmatpush1.msra.mxu0 0.0
        %763 = vmatprep.mubr.f32.mxu0 0.0
        %764 = vmatmul.mubr.f32.gmra.mrb[0].mxu0 %v698
        %v765 = vpop.f32.mrb[0].mxu0
        %v766 = vadd.f32 %v444, %v765
        %v767 = vpop.f32.mrb[0].mxu0
        %768 = vdwg.mxu0
        %769 = vmatprep.subr.mxu0 %v392
        %770 = vmatpush1.msra.mxu0 %v391
        %771 = vmatprep.subr.mxu0 %v394
        %772 = vmatpush1.msra.mxu0 %v393
        %773 = vmatprep.subr.mxu0 %v396
        %774 = vmatpush1.msra.mxu0 %v395
        %775 = vmatprep.subr.mxu0 %v398
        %776 = vmatpush1.msra.mxu0 %v397
        %777 = vmatprep.subr.mxu0 %v400
        %778 = vmatpush1.msra.mxu0 %v399
        %779 = vmatprep.subr.mxu0 %v402
        %780 = vmatpush1.msra.mxu0 %v401
        %781 = vmatprep.subr.mxu0 %v404
        %782 = vmatpush1.msra.mxu0 %v403
        %783 = vmatprep.subr.mxu0 %v406
        %784 = vmatpush1.msra.mxu0 %v405
        %785 = vmatprep.subr.mxu0 %v408
        %786 = vmatpush1.msra.mxu0 %v407
        %787 = vmatprep.subr.mxu0 %v410
        %788 = vmatpush1.msra.mxu0 %v409
        %789 = vmatprep.subr.mxu0 %v412
        %790 = vmatpush1.msra.mxu0 %v411
        %791 = vmatprep.subr.mxu0 %v414
        %792 = vmatpush1.msra.mxu0 %v413
        %793 = vmatprep.subr.mxu0 %v416
        %794 = vmatpush1.msra.mxu0 %v415
        %795 = vmatprep.subr.mxu0 %v418
        %796 = vmatpush1.msra.mxu0 %v417
        %797 = vmatprep.subr.mxu0 %v420
        %798 = vmatpush1.msra.mxu0 %v419
        %799 = vmatprep.subr.mxu0 %v422
        %800 = vmatpush1.msra.mxu0 %v421
        %801 = vmatprep.subr.mxu0 0.0
        %802 = vmatpush1.msra.mxu0 0.0
        %803 = vmatprep.subr.mxu0 0.0
        %804 = vmatpush1.msra.mxu0 0.0
        %805 = vmatprep.subr.mxu0 0.0
        %806 = vmatpush1.msra.mxu0 0.0
        %807 = vmatprep.subr.mxu0 0.0
        %808 = vmatpush1.msra.mxu0 0.0
        %809 = vmatprep.subr.mxu0 0.0
        %810 = vmatpush1.msra.mxu0 0.0
        %811 = vmatprep.subr.mxu0 0.0
        %812 = vmatpush1.msra.mxu0 0.0
        %813 = vmatprep.subr.mxu0 0.0
        %814 = vmatpush1.msra.mxu0 0.0
        %815 = vmatprep.subr.mxu0 0.0
        %816 = vmatpush1.msra.mxu0 0.0
        %817 = vmatprep.subr.mxu0 0.0
        %818 = vmatpush1.msra.mxu0 0.0
        %819 = vmatprep.subr.mxu0 0.0
        %820 = vmatpush1.msra.mxu0 0.0
        %821 = vmatprep.subr.mxu0 0.0
        %822 = vmatpush1.msra.mxu0 0.0
        %823 = vmatprep.subr.mxu0 0.0
        %824 = vmatpush1.msra.mxu0 0.0
        %825 = vmatprep.subr.mxu0 0.0
        %826 = vmatpush1.msra.mxu0 0.0
        %827 = vmatprep.subr.mxu0 0.0
        %828 = vmatpush1.msra.mxu0 0.0
        %829 = vmatprep.subr.mxu0 0.0
        %830 = vmatpush1.msra.mxu0 0.0
        %831 = vmatprep.subr.mxu0 0.0
        %832 = vmatpush1.msra.mxu0 0.0
        %833 = vmatprep.mubr.f32.mxu0 0.0
        %834 = vmatmul.mubr.f32.gmra.mrb[0].mxu0 %v766
        %v835 = vpop.f32.mrb[0].mxu0
        %v836 = vadd.f32 0.0, %v835
        %v837 = vpop.f32.mrb[0].mxu0
        %v838 = vadd.f32 0.0, %v837
        %839 = vdwg.mxu0
        %v840 = vrot.slane %v836, 4
        %v841 = vmax.f32 %v836, %v840
        %v842 = vrot.slane %v841, 2
        %v843 = vmax.f32 %v841, %v842
        %v844 = vrot.slane %v843, 1
        %v845 = vmax.f32 %v843, %v844
        %v846 = vsub.f32 %v836, %v845
        %v847 = vmul.f32 %v846, 1.442695
        %v848 = vpow.pop %v847
        %v849 = vrot.slane %v848, 4
        %v850 = vadd.f32 %v848, %v849
        %v851 = vrot.slane %v850, 2
        %v852 = vadd.f32 %v850, %v851
        %v853 = vrot.slane %v852, 1
        %v854 = vadd.f32 %v852, %v853
        %v855 = vrcp.pop %v854
        %v856 = vmul.f32 %v848, %v855
        %v857 = vmul.f32 %v856, %v766
        %v858 = vrot.slane %v857, 4
        %v859 = vadd.f32 %v857, %v858
        %v860 = vrot.slane %v859, 2
        %v861 = vadd.f32 %v859, %v860
        %v862 = vrot.slane %v861, 1
        %v863 = vadd.f32 %v861, %v862
        %v864 = vsub.f32 0.0, %v863
        %v865 = vmul.f32 %v864, 1.442695
        %v866 = vpow.pop %v865
        %v867 = vadd.f32 %v866, 1.0
        %v868 = vrcp.pop %v867
        %v869 = vmul.f32 1.0, %v868
        %870 = vmatprep.subr.mxu0 0.0
        %871 = vmatpush1.msra.mxu0 %v423
        %872 = vmatprep.subr.mxu0 0.0
        %873 = vmatpush1.msra.mxu0 %v424
        %874 = vmatprep.subr.mxu0 0.0
        %875 = vmatpush1.msra.mxu0 %v425
        %876 = vmatprep.subr.mxu0 0.0
        %877 = vmatpush1.msra.mxu0 %v426
        %878 = vmatprep.subr.mxu0 0.0
        %879 = vmatpush1.msra.mxu0 %v427
        %880 = vmatprep.subr.mxu0 0.0
        %881 = vmatpush1.msra.mxu0 %v428
        %882 = vmatprep.subr.mxu0 0.0
        %883 = vmatpush1.msra.mxu0 %v429
        %884 = vmatprep.subr.mxu0 0.0
        %885 = vmatpush1.msra.mxu0 %v430
        %886 = vmatprep.subr.mxu0 0.0
        %887 = vmatpush1.msra.mxu0 %v431
        %888 = vmatprep.subr.mxu0 0.0
        %889 = vmatpush1.msra.mxu0 %v432
        %890 = vmatprep.subr.mxu0 0.0
        %891 = vmatpush1.msra.mxu0 %v433
        %892 = vmatprep.subr.mxu0 0.0
        %893 = vmatpush1.msra.mxu0 %v434
        %894 = vmatprep.subr.mxu0 0.0
        %895 = vmatpush1.msra.mxu0 %v435
        %896 = vmatprep.subr.mxu0 0.0
        %897 = vmatpush1.msra.mxu0 %v436
        %898 = vmatprep.subr.mxu0 0.0
        %899 = vmatpush1.msra.mxu0 %v437
        %900 = vmatprep.subr.mxu0 0.0
        %901 = vmatpush1.msra.mxu0 %v438
        %902 = vmatprep.subr.mxu0 0.0
        %903 = vmatpush1.msra.mxu0 0.0
        %904 = vmatprep.subr.mxu0 0.0
        %905 = vmatpush1.msra.mxu0 0.0
        %906 = vmatprep.subr.mxu0 0.0
        %907 = vmatpush1.msra.mxu0 0.0
        %908 = vmatprep.subr.mxu0 0.0
        %909 = vmatpush1.msra.mxu0 0.0
        %910 = vmatprep.subr.mxu0 0.0
        %911 = vmatpush1.msra.mxu0 0.0
        %912 = vmatprep.subr.mxu0 0.0
        %913 = vmatpush1.msra.mxu0 0.0
        %914 = vmatprep.subr.mxu0 0.0
        %915 = vmatpush1.msra.mxu0 0.0
        %916 = vmatprep.subr.mxu0 0.0
        %917 = vmatpush1.msra.mxu0 0.0
        %918 = vmatprep.subr.mxu0 0.0
        %919 = vmatpush1.msra.mxu0 0.0
        %920 = vmatprep.subr.mxu0 0.0
        %921 = vmatpush1.msra.mxu0 0.0
        %922 = vmatprep.subr.mxu0 0.0
        %923 = vmatpush1.msra.mxu0 0.0
        %924 = vmatprep.subr.mxu0 0.0
        %925 = vmatpush1.msra.mxu0 0.0
        %926 = vmatprep.subr.mxu0 0.0
        %927 = vmatpush1.msra.mxu0 0.0
        %928 = vmatprep.subr.mxu0 0.0
        %929 = vmatpush1.msra.mxu0 0.0
        %930 = vmatprep.subr.mxu0 0.0
        %931 = vmatpush1.msra.mxu0 0.0
        %932 = vmatprep.subr.mxu0 0.0
        %933 = vmatpush1.msra.mxu0 0.0
        %934 = vmatprep.mubr.f32.mxu0 0.0
        %935 = vmatmul.mubr.f32.gmra.mrb[0].mxu0 %v869
        %v936 = vpop.f32.mrb[0].mxu0
        %v937 = vadd.f32 0.0, %v936
        %v938 = vpop.f32.mrb[0].mxu0
        %939 = vdwg.mxu0
        %v940 = vadd.f32 %v838, %v937
        %v941 = vadd.f32 %v940, %v451
        %v942 = vmul.f32 %v941, %v374
        %943 = vmatprep.subr.mxu0 0.0
        %944 = vmatpush1.msra.mxu0 %v375
        %945 = vmatprep.subr.mxu0 0.0
        %946 = vmatpush1.msra.mxu0 %v376
        %947 = vmatprep.subr.mxu0 0.0
        %948 = vmatpush1.msra.mxu0 %v377
        %949 = vmatprep.subr.mxu0 0.0
        %950 = vmatpush1.msra.mxu0 %v378
        %951 = vmatprep.subr.mxu0 0.0
        %952 = vmatpush1.msra.mxu0 %v379
        %953 = vmatprep.subr.mxu0 0.0
        %954 = vmatpush1.msra.mxu0 %v380
        %955 = vmatprep.subr.mxu0 0.0
        %956 = vmatpush1.msra.mxu0 %v381
        %957 = vmatprep.subr.mxu0 0.0
        %958 = vmatpush1.msra.mxu0 %v382
        %959 = vmatprep.subr.mxu0 0.0
        %960 = vmatpush1.msra.mxu0 %v383
        %961 = vmatprep.subr.mxu0 0.0
        %962 = vmatpush1.msra.mxu0 %v384
        %963 = vmatprep.subr.mxu0 0.0
        %964 = vmatpush1.msra.mxu0 %v385
        %965 = vmatprep.subr.mxu0 0.0
        %966 = vmatpush1.msra.mxu0 %v386
        %967 = vmatprep.subr.mxu0 0.0
        %968 = vmatpush1.msra.mxu0 %v387
        %969 = vmatprep.subr.mxu0 0.0
        %970 = vmatpush1.msra.mxu0 %v388
        %971 = vmatprep.subr.mxu0 0.0
        %972 = vmatpush1.msra.mxu0 %v389
        %973 = vmatprep.subr.mxu0 0.0
        %974 = vmatpush1.msra.mxu0 %v390
        %975 = vmatprep.subr.mxu0 0.0
        %976 = vmatpush1.msra.mxu0 0.0
        %977 = vmatprep.subr.mxu0 0.0
        %978 = vmatpush1.msra.mxu0 0.0
        %979 = vmatprep.subr.mxu0 0.0
        %980 = vmatpush1.msra.mxu0 0.0
        %981 = vmatprep.subr.mxu0 0.0
        %982 = vmatpush1.msra.mxu0 0.0
        %983 = vmatprep.subr.mxu0 0.0
        %984 = vmatpush1.msra.mxu0 0.0
        %985 = vmatprep.subr.mxu0 0.0
        %986 = vmatpush1.msra.mxu0 0.0
        %987 = vmatprep.subr.mxu0 0.0
        %988 = vmatpush1.msra.mxu0 0.0
        %989 = vmatprep.subr.mxu0 0.0
        %990 = vmatpush1.msra.mxu0 0.0
        %991 = vmatprep.subr.mxu0 0.0
        %992 = vmatpush1.msra.mxu0 0.0
        %993 = vmatprep.subr.mxu0 0.0
        %994 = vmatpush1.msra.mxu0 0.0
        %995 = vmatprep.subr.mxu0 0.0
        %996 = vmatpush1.msra.mxu0 0.0
        %997 = vmatprep.subr.mxu0 0.0
        %998 = vmatpush1.msra.mxu0 0.0
        %999 = vmatprep.subr.mxu0 0.0
        %1000 = vmatpush1.msra.mxu0 0.0
        %1001 = vmatprep.subr.mxu0 0.0
        %1002 = vmatpush1.msra.mxu0 0.0
        %1003 = vmatprep.subr.mxu0 0.0
        %1004 = vmatpush1.msra.mxu0 0.0
        %1005 = vmatprep.subr.mxu0 0.0
        %1006 = vmatpush1.msra.mxu0 0.0
        %1007 = vmatprep.mubr.f32.mxu0 0.0
        %1008 = vmatmul.mubr.f32.gmra.mrb[0].mxu0 %v942
        %v1009 = vpop.f32.mrb[0].mxu0
        %v1010 = vadd.f32 %v444, %v1009
        %v1011 = vpop.f32.mrb[0].mxu0
        %1012 = vdwg.mxu0
        %1013 = vmatprep.subr.mxu0 %v392
        %1014 = vmatpush1.msra.mxu0 %v391
        %1015 = vmatprep.subr.mxu0 %v394
        %1016 = vmatpush1.msra.mxu0 %v393
        %1017 = vmatprep.subr.mxu0 %v396
        %1018 = vmatpush1.msra.mxu0 %v395
        %1019 = vmatprep.subr.mxu0 %v398
        %1020 = vmatpush1.msra.mxu0 %v397
        %1021 = vmatprep.subr.mxu0 %v400
        %1022 = vmatpush1.msra.mxu0 %v399
        %1023 = vmatprep.subr.mxu0 %v402
        %1024 = vmatpush1.msra.mxu0 %v401
        %1025 = vmatprep.subr.mxu0 %v404
        %1026 = vmatpush1.msra.mxu0 %v403
        %1027 = vmatprep.subr.mxu0 %v406
        %1028 = vmatpush1.msra.mxu0 %v405
        %1029 = vmatprep.subr.mxu0 %v408
        %1030 = vmatpush1.msra.mxu0 %v407
        %1031 = vmatprep.subr.mxu0 %v410
        %1032 = vmatpush1.msra.mxu0 %v409
        %1033 = vmatprep.subr.mxu0 %v412
        %1034 = vmatpush1.msra.mxu0 %v411
        %1035 = vmatprep.subr.mxu0 %v414
        %1036 = vmatpush1.msra.mxu0 %v413
        %1037 = vmatprep.subr.mxu0 %v416
        %1038 = vmatpush1.msra.mxu0 %v415
        %1039 = vmatprep.subr.mxu0 %v418
        %1040 = vmatpush1.msra.mxu0 %v417
        %1041 = vmatprep.subr.mxu0 %v420
        %1042 = vmatpush1.msra.mxu0 %v419
        %1043 = vmatprep.subr.mxu0 %v422
        %1044 = vmatpush1.msra.mxu0 %v421
        %1045 = vmatprep.subr.mxu0 0.0
        %1046 = vmatpush1.msra.mxu0 0.0
        %1047 = vmatprep.subr.mxu0 0.0
        %1048 = vmatpush1.msra.mxu0 0.0
        %1049 = vmatprep.subr.mxu0 0.0
        %1050 = vmatpush1.msra.mxu0 0.0
        %1051 = vmatprep.subr.mxu0 0.0
        %1052 = vmatpush1.msra.mxu0 0.0
        %1053 = vmatprep.subr.mxu0 0.0
        %1054 = vmatpush1.msra.mxu0 0.0
        %1055 = vmatprep.subr.mxu0 0.0
        %1056 = vmatpush1.msra.mxu0 0.0
        %1057 = vmatprep.subr.mxu0 0.0
        %1058 = vmatpush1.msra.mxu0 0.0
        %1059 = vmatprep.subr.mxu0 0.0
        %1060 = vmatpush1.msra.mxu0 0.0
        %1061 = vmatprep.subr.mxu0 0.0
        %1062 = vmatpush1.msra.mxu0 0.0
        %1063 = vmatprep.subr.mxu0 0.0
        %1064 = vmatpush1.msra.mxu0 0.0
        %1065 = vmatprep.subr.mxu0 0.0
        %1066 = vmatpush1.msra.mxu0 0.0
        %1067 = vmatprep.subr.mxu0 0.0
        %1068 = vmatpush1.msra.mxu0 0.0
        %1069 = vmatprep.subr.mxu0 0.0
        %1070 = vmatpush1.msra.mxu0 0.0
        %1071 = vmatprep.subr.mxu0 0.0
        %1072 = vmatpush1.msra.mxu0 0.0
        %1073 = vmatprep.subr.mxu0 0.0
        %1074 = vmatpush1.msra.mxu0 0.0
        %1075 = vmatprep.subr.mxu0 0.0
        %1076 = vmatpush1.msra.mxu0 0.0
        %1077 = vmatprep.mubr.f32.mxu0 0.0
        %1078 = vmatmul.mubr.f32.gmra.mrb[0].mxu0 %v1010
        %v1079 = vpop.f32.mrb[0].mxu0
        %v1080 = vadd.f32 0.0, %v1079
        %v1081 = vpop.f32.mrb[0].mxu0
        %v1082 = vadd.f32 0.0, %v1081
        %1083 = vdwg.mxu0
        %v1084 = vrot.slane %v1080, 4
        %v1085 = vmax.f32 %v1080, %v1084
        %v1086 = vrot.slane %v1085, 2
        %v1087 = vmax.f32 %v1085, %v1086
        %v1088 = vrot.slane %v1087, 1
        %v1089 = vmax.f32 %v1087, %v1088
        %v1090 = vsub.f32 %v1080, %v1089
        %v1091 = vmul.f32 %v1090, 1.442695
        %v1092 = vpow.pop %v1091
        %v1093 = vrot.slane %v1092, 4
        %v1094 = vadd.f32 %v1092, %v1093
        %v1095 = vrot.slane %v1094, 2
        %v1096 = vadd.f32 %v1094, %v1095
        %v1097 = vrot.slane %v1096, 1
        %v1098 = vadd.f32 %v1096, %v1097
        %v1099 = vrcp.pop %v1098
        %v1100 = vmul.f32 %v1092, %v1099
        %v1101 = vmul.f32 %v1100, %v1010
        %v1102 = vrot.slane %v1101, 4
        %v1103 = vadd.f32 %v1101, %v1102
        %v1104 = vrot.slane %v1103, 2
        %v1105 = vadd.f32 %v1103, %v1104
        %v1106 = vrot.slane %v1105, 1
        %v1107 = vadd.f32 %v1105, %v1106
        %v1108 = vsub.f32 0.0, %v1107
        %v1109 = vmul.f32 %v1108, 1.442695
        %v1110 = vpow.pop %v1109
        %v1111 = vadd.f32 %v1110, 1.0
        %v1112 = vrcp.pop %v1111
        %v1113 = vmul.f32 1.0, %v1112
        %1114 = vmatprep.subr.mxu0 0.0
        %1115 = vmatpush1.msra.mxu0 %v423
        %1116 = vmatprep.subr.mxu0 0.0
        %1117 = vmatpush1.msra.mxu0 %v424
        %1118 = vmatprep.subr.mxu0 0.0
        %1119 = vmatpush1.msra.mxu0 %v425
        %1120 = vmatprep.subr.mxu0 0.0
        %1121 = vmatpush1.msra.mxu0 %v426
        %1122 = vmatprep.subr.mxu0 0.0
        %1123 = vmatpush1.msra.mxu0 %v427
        %1124 = vmatprep.subr.mxu0 0.0
        %1125 = vmatpush1.msra.mxu0 %v428
        %1126 = vmatprep.subr.mxu0 0.0
        %1127 = vmatpush1.msra.mxu0 %v429
        %1128 = vmatprep.subr.mxu0 0.0
        %1129 = vmatpush1.msra.mxu0 %v430
        %1130 = vmatprep.subr.mxu0 0.0
        %1131 = vmatpush1.msra.mxu0 %v431
        %1132 = vmatprep.subr.mxu0 0.0
        %1133 = vmatpush1.msra.mxu0 %v432
        %1134 = vmatprep.subr.mxu0 0.0
        %1135 = vmatpush1.msra.mxu0 %v433
        %1136 = vmatprep.subr.mxu0 0.0
        %1137 = vmatpush1.msra.mxu0 %v434
        %1138 = vmatprep.subr.mxu0 0.0
        %1139 = vmatpush1.msra.mxu0 %v435
        %1140 = vmatprep.subr.mxu0 0.0
        %1141 = vmatpush1.msra.mxu0 %v436
        %1142 = vmatprep.subr.mxu0 0.0
        %1143 = vmatpush1.msra.mxu0 %v437
        %1144 = vmatprep.subr.mxu0 0.0
        %1145 = vmatpush1.msra.mxu0 %v438
        %1146 = vmatprep.subr.mxu0 0.0
        %1147 = vmatpush1.msra.mxu0 0.0
        %1148 = vmatprep.subr.mxu0 0.0
        %1149 = vmatpush1.msra.mxu0 0.0
        %1150 = vmatprep.subr.mxu0 0.0
        %1151 = vmatpush1.msra.mxu0 0.0
        %1152 = vmatprep.subr.mxu0 0.0
        %1153 = vmatpush1.msra.mxu0 0.0
        %1154 = vmatprep.subr.mxu0 0.0
        %1155 = vmatpush1.msra.mxu0 0.0
        %1156 = vmatprep.subr.mxu0 0.0
        %1157 = vmatpush1.msra.mxu0 0.0
        %1158 = vmatprep.subr.mxu0 0.0
        %1159 = vmatpush1.msra.mxu0 0.0
        %1160 = vmatprep.subr.mxu0 0.0
        %1161 = vmatpush1.msra.mxu0 0.0
        %1162 = vmatprep.subr.mxu0 0.0
        %1163 = vmatpush1.msra.mxu0 0.0
        %1164 = vmatprep.subr.mxu0 0.0
        %1165 = vmatpush1.msra.mxu0 0.0
        %1166 = vmatprep.subr.mxu0 0.0
        %1167 = vmatpush1.msra.mxu0 0.0
        %1168 = vmatprep.subr.mxu0 0.0
        %1169 = vmatpush1.msra.mxu0 0.0
        %1170 = vmatprep.subr.mxu0 0.0
        %1171 = vmatpush1.msra.mxu0 0.0
        %1172 = vmatprep.subr.mxu0 0.0
        %1173 = vmatpush1.msra.mxu0 0.0
        %1174 = vmatprep.subr.mxu0 0.0
        %1175 = vmatpush1.msra.mxu0 0.0
        %1176 = vmatprep.subr.mxu0 0.0
        %1177 = vmatpush1.msra.mxu0 0.0
        %1178 = vmatprep.mubr.f32.mxu0 0.0
        %1179 = vmatmul.mubr.f32.gmra.mrb[0].mxu0 %v1113
        %v1180 = vpop.f32.mrb[0].mxu0
        %v1181 = vadd.f32 0.0, %v1180
        %v1182 = vpop.f32.mrb[0].mxu0
        %1183 = vdwg.mxu0
        %v1184 = vadd.f32 %v1082, %v1181
        %v1185 = vadd.f32 %v1184, %v451
        %1186 = vst [vmem:[%s373] sm:$0xff] %v1185
        %s1187 = sand.u32 %s193, 1
        %s1188 = scalar_lea.sflag [#allocation4], %s1187
        %s1189 = sand.u32 %s193, 1
        %s1190 = smul.addr %s1189, 8
        %s1191 = scalar_lea.vmem [#allocation11], %s1190
        // Predicated region
        $region69: #{tpu_custom_call.1} parent=47 // pred_check
          %p1192 = pneg %p203
        $region70: #{tpu_custom_call.1} parent=47 // pred_check_branch
          %1194 = sbr.rel (%p1192) target = $region72
        $region71: #{tpu_custom_call.1} parent=47 // pred_region
          %s1196 = ssub.s32 128, 128
          %1197 = vsyncadd %s1188, %s1196
          %s1198 = smul.addr %s28, 128
          %s1199 = scalar_lea.hbm %s7, %s1198
          %s1201 = sshll.u32 %s1191, 4
          %s1202 = int_to_ptr.vmem [resolvable:$true] %s1201
          %1204 = dma.vmem_to_hbm [thread:$0]  %s1202, 128, %s1199, %s1188
        $region72: #{tpu_custom_call.1} parent=47 // pred_fallthru
          _
      $region48: #{tpu_custom_call.1} parent=5 // pred_fallthru
        _
      %p1205 = scmp.le.s32.totalorder 2, %s23
      // Predicated region
      $region73: #{tpu_custom_call.1} parent=5 // pred_check
        %p1206 = pneg %p1205
      $region74: #{tpu_custom_call.1} parent=5 // pred_check_branch
        %1208 = sbr.rel (%p1206) target = $region76
      $region75: #{tpu_custom_call.1} parent=5 // pred_region
        %s1209 = ssub.s32 %s23, 2
        // Predicated region
        $region77: #{tpu_custom_call.1} parent=75 // pred_check
          %p1210 = pneg %p209
        $region78: #{tpu_custom_call.1} parent=75 // pred_check_branch
          %1212 = sbr.rel (%p1210) target = $region80
        $region79: #{tpu_custom_call.1} parent=75 // pred_region
          %s1213 = sand.u32 %s194, 1
          %s1214 = scalar_lea.sflag [#allocation4], %s1213
          %s1215 = sand.u32 %s194, 1
          %s1216 = smul.addr %s1215, 8
          %s1217 = scalar_lea.vmem [#allocation11], %s1216
          %1218 = dma.done %s1214, 128
        $region80: #{tpu_custom_call.1} parent=75 // pred_fallthru
          _
      $region76: #{tpu_custom_call.1} parent=5 // pred_fallthru
        _
    $region6: #{tpu_custom_call.1} parent=1 // loop_footer
      %s27 = sadd.s32 1, %s23
    $region7: #{tpu_custom_call.1} parent=1 // loop_footer_branch
      %22 = sbr.rel target = $region3
    $region8: #{tpu_custom_call.1} parent=1 // loop_exit
      _
    %1219 = vsyncpa [#allocation3], 1
    %s1220 = scalar_lea.sflag [#allocation3], 1
    %1221 = vsyncpa %s1220, 1
    %1222 = vsyncpa [#allocation6], 1
    %s1223 = scalar_lea.sflag [#allocation6], 1
    %1224 = vsyncpa %s1223, 1
    %1225 = vsyncpa [#allocation9], 1
    %1226 = vsyncpa [#allocation4], 1
    %s1227 = scalar_lea.sflag [#allocation4], 1
    %1228 = vsyncpa %s1227, 1

</llo_original>
